<compile_context>
chip_gen: v7x
topology: tpu7x:2x2x1
jax: 0.10.0
libtpu: 0.0.40
codegen_flags: <defaults>
</compile_context>

<pallas_src>
import jax
import jax.numpy as jnp
from jax import lax
from jax.experimental import pallas as pl
from jax.experimental.pallas import tpu as pltpu

N_CLASS = 26        # len('abcdefghijklmnopqrstuvwxyz')
N_HIDDEN = 128
N_CLASS_PAD = 128   # lane-dense padded output width


def bilstm_kernel(x_ref,        # (T*B, C)   time-major flattened input
                  wih_ref,      # (C, 8H)    [W_ih_f | W_ih_b], pre-transposed
                  bgate_ref,    # (1, 8H)    folded (b_ih + b_hh) for both dirs
                  whh_f_ref,    # (H, 4H)    forward recurrent weights
                  w_ref,        # (2H, Cpad) final projection (lane padded)
                  bproj_ref,    # (1, Cpad)
                  out_ref,      # (B, Cpad)
                  pre_ref):     # VMEM scratch (T*B, 8H)
    TB, _ = x_ref.shape
    H = whh_f_ref.shape[0]
    B = out_ref.shape[0]
    T = TB // B

    # Load the recurrent weight once, before the serial chain.
    whh_f = whh_f_ref[...]

    # ---- hoisted input projection for BOTH directions, bias folded ----
    # one (T*B, C) @ (C, 8H) matmul instead of 2*T tiny matmuls in the loop
    pre_ref[...] = (
        jnp.dot(x_ref[...], wih_ref[...], preferred_element_type=jnp.float32)
        + bgate_ref[...]
    )

    h = jnp.zeros((B, H), jnp.float32)
    c = jnp.zeros((B, H), jnp.float32)

    # ---- forward direction: fully unrolled serial recurrence (static T) ----
    for t in range(T):
        g = (pre_ref[t * B:(t + 1) * B, 0:4 * H]
             + jnp.dot(h, whh_f, preferred_element_type=jnp.float32))
        i = jax.nn.sigmoid(g[:, 0 * H:1 * H])
        f = jax.nn.sigmoid(g[:, 1 * H:2 * H])
        gg = jnp.tanh(g[:, 2 * H:3 * H])
        o = jax.nn.sigmoid(g[:, 3 * H:4 * H])
        c = f * c + i * gg
        h = o * jnp.tanh(c)
    h_fwd = h

    # ---- backward direction: outputs[-1] == one reverse step on x[T-1] from
    #      the zero state, so h0 @ W_hh_b == 0 and f * c0 == 0. ----
    gb = pre_ref[(T - 1) * B:T * B, 4 * H:8 * H]
    ib = jax.nn.sigmoid(gb[:, 0 * H:1 * H])
    ggb = jnp.tanh(gb[:, 2 * H:3 * H])
    ob = jax.nn.sigmoid(gb[:, 3 * H:4 * H])
    cb = ib * ggb
    h_bwd = ob * jnp.tanh(cb)

    # ---- final projection (lane-dense padded output) ----
    h_cat = jnp.concatenate([h_fwd, h_bwd], axis=-1)      # (B, 2H)
    out_ref[...] = (
        jnp.dot(h_cat, w_ref[...], preferred_element_type=jnp.float32)
        + bproj_ref[...]
    )


def text_bi_lstm_forward(x, params):
    """x: (batch, seq, n_class) float32 -> (batch, n_class) float32."""
    B, T, C = x.shape
    H = N_HIDDEN
    (wih_f, whh_f, bih_f, bhh_f,
     wih_b, whh_b, bih_b, bhh_b,
     W, b) = params

    # Time-major, flattened to (T*B, C) so the input projection is one matmul.
    x_flat = jnp.transpose(x, (1, 0, 2)).reshape(T * B, C)

    # Fuse both directions' input weights / biases: (C, 8H) and (1, 8H).
    wih = jnp.concatenate([wih_f.T, wih_b.T], axis=1)
    bgate = jnp.concatenate([bih_f + bhh_f, bih_b + bhh_b])[None, :]
    whh_f_t = whh_f.T                                   # (H, 4H)
    # whh_b is not needed: reverse direction only does one step from h0 == 0.

    # Lane-dense output: pad projection to 128 lanes, slice back afterwards.
    pad = N_CLASS_PAD - C
    W_pad = jnp.pad(W, ((0, 0), (0, pad)))              # (2H, Cpad)
    b_pad = jnp.pad(b, (0, pad))[None, :]               # (1, Cpad)

    cost = pl.CostEstimate(
        flops=(2 * T * B * C * 8 * H            # hoisted input projection
               + T * 2 * B * H * 4 * H          # recurrent matmuls
               + 2 * B * 2 * H * N_CLASS_PAD),  # final projection
        transcendentals=2 * T * B * 4 * H,
        bytes_accessed=4 * (T * B * C + C * 8 * H + H * 4 * H
                            + 2 * H * N_CLASS_PAD + B * N_CLASS_PAD),
    )

    out_pad = pl.pallas_call(
        bilstm_kernel,
        out_shape=jax.ShapeDtypeStruct((B, N_CLASS_PAD), jnp.float32),
        scratch_shapes=[pltpu.VMEM((T * B, 8 * H), jnp.float32)],
        cost_estimate=cost,
    )(x_flat, wih, bgate, whh_f_t, W_pad, b_pad)

    return out_pad[:, :C]


def reference_forward(x, params):
    """Pure-JAX reference: full bidirectional LSTM, take outputs[-1], project."""
    B, T, C = x.shape
    (wih_f, whh_f, bih_f, bhh_f,
     wih_b, whh_b, bih_b, bhh_b,
     W, b) = params
    H = N_HIDDEN

    def cell(x_t, h, c, wih, whh, bih, bhh):
        g = x_t @ wih.T + bih + h @ whh.T + bhh
        i = jax.nn.sigmoid(g[:, 0 * H:1 * H])
        f = jax.nn.sigmoid(g[:, 1 * H:2 * H])
        gg = jnp.tanh(g[:, 2 * H:3 * H])
        o = jax.nn.sigmoid(g[:, 3 * H:4 * H])
        c_new = f * c + i * gg
        return o * jnp.tanh(c_new), c_new

    x_tm = jnp.transpose(x, (1, 0, 2))
    h = jnp.zeros((B, H), jnp.float32)
    c = jnp.zeros((B, H), jnp.float32)
    for t in range(T):
        h, c = cell(x_tm[t], h, c, wih_f, whh_f, bih_f, bhh_f)
    h_fwd_last = h

    # Reverse direction: outputs_rev[T-1] is after processing just x[T-1].
    h = jnp.zeros((B, H), jnp.float32)
    c = jnp.zeros((B, H), jnp.float32)
    h, c = cell(x_tm[T - 1], h, c, wih_b, whh_b, bih_b, bhh_b)
    h_bwd_last = h

    out = jnp.concatenate([h_fwd_last, h_bwd_last], axis=-1)
    return out @ W + b


def init_params(key):
    H, C = N_HIDDEN, N_CLASS
    ks = jax.random.split(key, 10)
    scale = 1.0 / jnp.sqrt(H)
    wih_f = jax.random.uniform(ks[0], (4 * H, C), jnp.float32, -scale, scale)
    whh_f = jax.random.uniform(ks[1], (4 * H, H), jnp.float32, -scale, scale)
    bih_f = jax.random.uniform(ks[2], (4 * H,), jnp.float32, -scale, scale)
    bhh_f = jax.random.uniform(ks[3], (4 * H,), jnp.float32, -scale, scale)
    wih_b = jax.random.uniform(ks[4], (4 * H, C), jnp.float32, -scale, scale)
    whh_b = jax.random.uniform(ks[5], (4 * H, H), jnp.float32, -scale, scale)
    bih_b = jax.random.uniform(ks[6], (4 * H,), jnp.float32, -scale, scale)
    bhh_b = jax.random.uniform(ks[7], (4 * H,), jnp.float32, -scale, scale)
    W = jax.random.normal(ks[8], (2 * H, C), jnp.float32)
    b = jax.random.normal(ks[9], (C,), jnp.float32)
    return (wih_f, whh_f, bih_f, bhh_f,
            wih_b, whh_b, bih_b, bhh_b, W, b)


if __name__ == "__main__":
    key = jax.random.PRNGKey(0)
    k_x, k_p = jax.random.split(key)

    batch, seq = 8, 8
    # one-hot float inputs (the original demo feeds one-hot char vectors)
    idx = jax.random.randint(k_x, (batch, seq), 0, N_CLASS)
    x = jax.nn.one_hot(idx, N_CLASS, dtype=jnp.float32)   # (batch, seq, n_class)

    params = init_params(k_p)

    out = text_bi_lstm_forward(x, params)
    out = jax.block_until_ready(out)

    ref = reference_forward(x, params)
    assert out.shape == (batch, N_CLASS)
    assert jnp.allclose(out, ref, atol=1e-4, rtol=1e-4), "mismatch vs reference"

    print("KERNEL_OK")
</pallas_src>

<mosaic_0001>
module attributes {stable_mosaic.version = 11 : i64} {
  func.func @bilstm_kernel(%arg0: memref<64x26xf32, #tpu.memory_space<vmem>>, %arg1: memref<26x1024xf32, #tpu.memory_space<vmem>>, %arg2: memref<1x1024xf32, #tpu.memory_space<vmem>>, %arg3: memref<128x512xf32, #tpu.memory_space<vmem>>, %arg4: memref<256x128xf32, #tpu.memory_space<vmem>>, %arg5: memref<1x128xf32, #tpu.memory_space<vmem>>, %arg6: memref<8x128xf32, #tpu.memory_space<vmem>>, %arg7: memref<64x1024xf32, #tpu.memory_space<vmem>>) attributes {dimension_semantics = [], scalar_prefetch = 0 : i64, scratch_operands = 1 : i64, tpu.core_type = #tpu.core_type<tc>} {
    %c0 = arith.constant 0 : index
    %c0_0 = arith.constant 0 : index
    %0 = vector.load %arg3[%c0, %c0_0] : memref<128x512xf32, #tpu.memory_space<vmem>>, vector<128x512xf32>
    %c0_1 = arith.constant 0 : index
    %c0_2 = arith.constant 0 : index
    %1 = vector.load %arg0[%c0_1, %c0_2] : memref<64x26xf32, #tpu.memory_space<vmem>>, vector<64x26xf32>
    %c0_3 = arith.constant 0 : index
    %c0_4 = arith.constant 0 : index
    %2 = vector.load %arg1[%c0_3, %c0_4] : memref<26x1024xf32, #tpu.memory_space<vmem>>, vector<26x1024xf32>
    %cst = arith.constant dense<0.000000e+00> : vector<64x1024xf32>
    %3 = tpu.matmul %1, %2, %cst {dimension_numbers = #tpu.dot_dimension_numbers<[1], [0], [0], [1], [0, 0, 1, 1], [], []>} : vector<64x26xf32>, vector<26x1024xf32>, vector<64x1024xf32> -> vector<64x1024xf32>
    %c0_5 = arith.constant 0 : index
    %c0_6 = arith.constant 0 : index
    %4 = vector.load %arg2[%c0_5, %c0_6] : memref<1x1024xf32, #tpu.memory_space<vmem>>, vector<1x1024xf32>
    %5 = vector.broadcast %4 : vector<1x1024xf32> to vector<64x1024xf32>
    %6 = arith.addf %3, %5 : vector<64x1024xf32>
    %c0_7 = arith.constant 0 : index
    %c0_8 = arith.constant 0 : index
    %7 = vector.load %arg7[%c0_7, %c0_8] : memref<64x1024xf32, #tpu.memory_space<vmem>>, vector<64x1024xf32>
    tpu.vector_store %arg7[%c0_7, %c0_8], %6 {strides = array<i32>} : memref<64x1024xf32, #tpu.memory_space<vmem>>, vector<64x1024xf32>,
    %cst_9 = arith.constant 0.000000e+00 : f32
    %8 = vector.broadcast %cst_9 : f32 to vector<8x128xf32>
    %cst_10 = arith.constant 0.000000e+00 : f32
    %9 = vector.broadcast %cst_10 : f32 to vector<8x128xf32>
    %c0_11 = arith.constant 0 : index
    %c0_12 = arith.constant 0 : index
    %10 = vector.load %arg7[%c0_11, %c0_12] : memref<64x1024xf32, #tpu.memory_space<vmem>>, vector<8x512xf32>
    %cst_13 = arith.constant dense<0.000000e+00> : vector<8x512xf32>
    %11 = tpu.matmul %8, %0, %cst_13 {dimension_numbers = #tpu.dot_dimension_numbers<[1], [0], [0], [1], [0, 0, 1, 1], [], []>} : vector<8x128xf32>, vector<128x512xf32>, vector<8x512xf32> -> vector<8x512xf32>
    %12 = arith.addf %10, %11 : vector<8x512xf32>
    %13 = vector.extract_strided_slice %12 {offsets = [0, 0], sizes = [8, 128], strides = [1, 1]} : vector<8x512xf32> to vector<8x128xf32>
    %14 = arith.negf %13 : vector<8x128xf32>
    %15 = math.exp %14 : vector<8x128xf32>
    %cst_14 = arith.constant 1.000000e+00 : f32
    %16 = vector.broadcast %cst_14 : f32 to vector<8x128xf32>
    %17 = arith.addf %16, %15 : vector<8x128xf32>
    %18 = arith.divf %16, %17 : vector<8x128xf32>
    %19 = vector.extract_strided_slice %12 {offsets = [0, 128], sizes = [8, 128], strides = [1, 1]} : vector<8x512xf32> to vector<8x128xf32>
    %20 = arith.negf %19 : vector<8x128xf32>
    %21 = math.exp %20 : vector<8x128xf32>
    %cst_15 = arith.constant 1.000000e+00 : f32
    %22 = vector.broadcast %cst_15 : f32 to vector<8x128xf32>
    %23 = arith.addf %22, %21 : vector<8x128xf32>
    %24 = arith.divf %22, %23 : vector<8x128xf32>
    %25 = vector.extract_strided_slice %12 {offsets = [0, 256], sizes = [8, 128], strides = [1, 1]} : vector<8x512xf32> to vector<8x128xf32>
    %26 = math.tanh %25 : vector<8x128xf32>
    %27 = vector.extract_strided_slice %12 {offsets = [0, 384], sizes = [8, 128], strides = [1, 1]} : vector<8x512xf32> to vector<8x128xf32>
    %28 = arith.negf %27 : vector<8x128xf32>
    %29 = math.exp %28 : vector<8x128xf32>
    %cst_16 = arith.constant 1.000000e+00 : f32
    %30 = vector.broadcast %cst_16 : f32 to vector<8x128xf32>
    %31 = arith.addf %30, %29 : vector<8x128xf32>
    %32 = arith.divf %30, %31 : vector<8x128xf32>
    %33 = arith.mulf %24, %9 : vector<8x128xf32>
    %34 = arith.mulf %18, %26 : vector<8x128xf32>
    %35 = arith.addf %33, %34 : vector<8x128xf32>
    %36 = math.tanh %35 : vector<8x128xf32>
    %37 = arith.mulf %32, %36 : vector<8x128xf32>
    %c8 = arith.constant 8 : index
    %c0_17 = arith.constant 0 : index
    %38 = vector.load %arg7[%c8, %c0_17] : memref<64x1024xf32, #tpu.memory_space<vmem>>, vector<8x512xf32>
    %cst_18 = arith.constant dense<0.000000e+00> : vector<8x512xf32>
    %39 = tpu.matmul %37, %0, %cst_18 {dimension_numbers = #tpu.dot_dimension_numbers<[1], [0], [0], [1], [0, 0, 1, 1], [], []>} : vector<8x128xf32>, vector<128x512xf32>, vector<8x512xf32> -> vector<8x512xf32>
    %40 = arith.addf %38, %39 : vector<8x512xf32>
    %41 = vector.extract_strided_slice %40 {offsets = [0, 0], sizes = [8, 128], strides = [1, 1]} : vector<8x512xf32> to vector<8x128xf32>
    %42 = arith.negf %41 : vector<8x128xf32>
    %43 = math.exp %42 : vector<8x128xf32>
    %cst_19 = arith.constant 1.000000e+00 : f32
    %44 = vector.broadcast %cst_19 : f32 to vector<8x128xf32>
    %45 = arith.addf %44, %43 : vector<8x128xf32>
    %46 = arith.divf %44, %45 : vector<8x128xf32>
    %47 = vector.extract_strided_slice %40 {offsets = [0, 128], sizes = [8, 128], strides = [1, 1]} : vector<8x512xf32> to vector<8x128xf32>
    %48 = arith.negf %47 : vector<8x128xf32>
    %49 = math.exp %48 : vector<8x128xf32>
    %cst_20 = arith.constant 1.000000e+00 : f32
    %50 = vector.broadcast %cst_20 : f32 to vector<8x128xf32>
    %51 = arith.addf %50, %49 : vector<8x128xf32>
    %52 = arith.divf %50, %51 : vector<8x128xf32>
    %53 = vector.extract_strided_slice %40 {offsets = [0, 256], sizes = [8, 128], strides = [1, 1]} : vector<8x512xf32> to vector<8x128xf32>
    %54 = math.tanh %53 : vector<8x128xf32>
    %55 = vector.extract_strided_slice %40 {offsets = [0, 384], sizes = [8, 128], strides = [1, 1]} : vector<8x512xf32> to vector<8x128xf32>
    %56 = arith.negf %55 : vector<8x128xf32>
    %57 = math.exp %56 : vector<8x128xf32>
    %cst_21 = arith.constant 1.000000e+00 : f32
    %58 = vector.broadcast %cst_21 : f32 to vector<8x128xf32>
    %59 = arith.addf %58, %57 : vector<8x128xf32>
    %60 = arith.divf %58, %59 : vector<8x128xf32>
    %61 = arith.mulf %52, %35 : vector<8x128xf32>
    %62 = arith.mulf %46, %54 : vector<8x128xf32>
    %63 = arith.addf %61, %62 : vector<8x128xf32>
    %64 = math.tanh %63 : vector<8x128xf32>
    %65 = arith.mulf %60, %64 : vector<8x128xf32>
    %c16 = arith.constant 16 : index
    %c0_22 = arith.constant 0 : index
    %66 = vector.load %arg7[%c16, %c0_22] : memref<64x1024xf32, #tpu.memory_space<vmem>>, vector<8x512xf32>
    %cst_23 = arith.constant dense<0.000000e+00> : vector<8x512xf32>
    %67 = tpu.matmul %65, %0, %cst_23 {dimension_numbers = #tpu.dot_dimension_numbers<[1], [0], [0], [1], [0, 0, 1, 1], [], []>} : vector<8x128xf32>, vector<128x512xf32>, vector<8x512xf32> -> vector<8x512xf32>
    %68 = arith.addf %66, %67 : vector<8x512xf32>
    %69 = vector.extract_strided_slice %68 {offsets = [0, 0], sizes = [8, 128], strides = [1, 1]} : vector<8x512xf32> to vector<8x128xf32>
    %70 = arith.negf %69 : vector<8x128xf32>
    %71 = math.exp %70 : vector<8x128xf32>
    %cst_24 = arith.constant 1.000000e+00 : f32
    %72 = vector.broadcast %cst_24 : f32 to vector<8x128xf32>
    %73 = arith.addf %72, %71 : vector<8x128xf32>
    %74 = arith.divf %72, %73 : vector<8x128xf32>
    %75 = vector.extract_strided_slice %68 {offsets = [0, 128], sizes = [8, 128], strides = [1, 1]} : vector<8x512xf32> to vector<8x128xf32>
    %76 = arith.negf %75 : vector<8x128xf32>
    %77 = math.exp %76 : vector<8x128xf32>
    %cst_25 = arith.constant 1.000000e+00 : f32
    %78 = vector.broadcast %cst_25 : f32 to vector<8x128xf32>
    %79 = arith.addf %78, %77 : vector<8x128xf32>
    %80 = arith.divf %78, %79 : vector<8x128xf32>
    %81 = vector.extract_strided_slice %68 {offsets = [0, 256], sizes = [8, 128], strides = [1, 1]} : vector<8x512xf32> to vector<8x128xf32>
    %82 = math.tanh %81 : vector<8x128xf32>
    %83 = vector.extract_strided_slice %68 {offsets = [0, 384], sizes = [8, 128], strides = [1, 1]} : vector<8x512xf32> to vector<8x128xf32>
    %84 = arith.negf %83 : vector<8x128xf32>
    %85 = math.exp %84 : vector<8x128xf32>
    %cst_26 = arith.constant 1.000000e+00 : f32
    %86 = vector.broadcast %cst_26 : f32 to vector<8x128xf32>
    %87 = arith.addf %86, %85 : vector<8x128xf32>
    %88 = arith.divf %86, %87 : vector<8x128xf32>
    %89 = arith.mulf %80, %63 : vector<8x128xf32>
    %90 = arith.mulf %74, %82 : vector<8x128xf32>
    %91 = arith.addf %89, %90 : vector<8x128xf32>
    %92 = math.tanh %91 : vector<8x128xf32>
    %93 = arith.mulf %88, %92 : vector<8x128xf32>
    %c24 = arith.constant 24 : index
    %c0_27 = arith.constant 0 : index
    %94 = vector.load %arg7[%c24, %c0_27] : memref<64x1024xf32, #tpu.memory_space<vmem>>, vector<8x512xf32>
    %cst_28 = arith.constant dense<0.000000e+00> : vector<8x512xf32>
    %95 = tpu.matmul %93, %0, %cst_28 {dimension_numbers = #tpu.dot_dimension_numbers<[1], [0], [0], [1], [0, 0, 1, 1], [], []>} : vector<8x128xf32>, vector<128x512xf32>, vector<8x512xf32> -> vector<8x512xf32>
    %96 = arith.addf %94, %95 : vector<8x512xf32>
    %97 = vector.extract_strided_slice %96 {offsets = [0, 0], sizes = [8, 128], strides = [1, 1]} : vector<8x512xf32> to vector<8x128xf32>
    %98 = arith.negf %97 : vector<8x128xf32>
    %99 = math.exp %98 : vector<8x128xf32>
    %cst_29 = arith.constant 1.000000e+00 : f32
    %100 = vector.broadcast %cst_29 : f32 to vector<8x128xf32>
    %101 = arith.addf %100, %99 : vector<8x128xf32>
    %102 = arith.divf %100, %101 : vector<8x128xf32>
    %103 = vector.extract_strided_slice %96 {offsets = [0, 128], sizes = [8, 128], strides = [1, 1]} : vector<8x512xf32> to vector<8x128xf32>
    %104 = arith.negf %103 : vector<8x128xf32>
    %105 = math.exp %104 : vector<8x128xf32>
    %cst_30 = arith.constant 1.000000e+00 : f32
    %106 = vector.broadcast %cst_30 : f32 to vector<8x128xf32>
    %107 = arith.addf %106, %105 : vector<8x128xf32>
    %108 = arith.divf %106, %107 : vector<8x128xf32>
    %109 = vector.extract_strided_slice %96 {offsets = [0, 256], sizes = [8, 128], strides = [1, 1]} : vector<8x512xf32> to vector<8x128xf32>
    %110 = math.tanh %109 : vector<8x128xf32>
    %111 = vector.extract_strided_slice %96 {offsets = [0, 384], sizes = [8, 128], strides = [1, 1]} : vector<8x512xf32> to vector<8x128xf32>
    %112 = arith.negf %111 : vector<8x128xf32>
    %113 = math.exp %112 : vector<8x128xf32>
    %cst_31 = arith.constant 1.000000e+00 : f32
    %114 = vector.broadcast %cst_31 : f32 to vector<8x128xf32>
    %115 = arith.addf %114, %113 : vector<8x128xf32>
    %116 = arith.divf %114, %115 : vector<8x128xf32>
    %117 = arith.mulf %108, %91 : vector<8x128xf32>
    %118 = arith.mulf %102, %110 : vector<8x128xf32>
    %119 = arith.addf %117, %118 : vector<8x128xf32>
    %120 = math.tanh %119 : vector<8x128xf32>
    %121 = arith.mulf %116, %120 : vector<8x128xf32>
    %c32 = arith.constant 32 : index
    %c0_32 = arith.constant 0 : index
    %122 = vector.load %arg7[%c32, %c0_32] : memref<64x1024xf32, #tpu.memory_space<vmem>>, vector<8x512xf32>
    %cst_33 = arith.constant dense<0.000000e+00> : vector<8x512xf32>
    %123 = tpu.matmul %121, %0, %cst_33 {dimension_numbers = #tpu.dot_dimension_numbers<[1], [0], [0], [1], [0, 0, 1, 1], [], []>} : vector<8x128xf32>, vector<128x512xf32>, vector<8x512xf32> -> vector<8x512xf32>
    %124 = arith.addf %122, %123 : vector<8x512xf32>
    %125 = vector.extract_strided_slice %124 {offsets = [0, 0], sizes = [8, 128], strides = [1, 1]} : vector<8x512xf32> to vector<8x128xf32>
    %126 = arith.negf %125 : vector<8x128xf32>
    %127 = math.exp %126 : vector<8x128xf32>
    %cst_34 = arith.constant 1.000000e+00 : f32
    %128 = vector.broadcast %cst_34 : f32 to vector<8x128xf32>
    %129 = arith.addf %128, %127 : vector<8x128xf32>
    %130 = arith.divf %128, %129 : vector<8x128xf32>
    %131 = vector.extract_strided_slice %124 {offsets = [0, 128], sizes = [8, 128], strides = [1, 1]} : vector<8x512xf32> to vector<8x128xf32>
    %132 = arith.negf %131 : vector<8x128xf32>
    %133 = math.exp %132 : vector<8x128xf32>
    %cst_35 = arith.constant 1.000000e+00 : f32
    %134 = vector.broadcast %cst_35 : f32 to vector<8x128xf32>
    %135 = arith.addf %134, %133 : vector<8x128xf32>
    %136 = arith.divf %134, %135 : vector<8x128xf32>
    %137 = vector.extract_strided_slice %124 {offsets = [0, 256], sizes = [8, 128], strides = [1, 1]} : vector<8x512xf32> to vector<8x128xf32>
    %138 = math.tanh %137 : vector<8x128xf32>
    %139 = vector.extract_strided_slice %124 {offsets = [0, 384], sizes = [8, 128], strides = [1, 1]} : vector<8x512xf32> to vector<8x128xf32>
    %140 = arith.negf %139 : vector<8x128xf32>
    %141 = math.exp %140 : vector<8x128xf32>
    %cst_36 = arith.constant 1.000000e+00 : f32
    %142 = vector.broadcast %cst_36 : f32 to vector<8x128xf32>
    %143 = arith.addf %142, %141 : vector<8x128xf32>
    %144 = arith.divf %142, %143 : vector<8x128xf32>
    %145 = arith.mulf %136, %119 : vector<8x128xf32>
    %146 = arith.mulf %130, %138 : vector<8x128xf32>
    %147 = arith.addf %145, %146 : vector<8x128xf32>
    %148 = math.tanh %147 : vector<8x128xf32>
    %149 = arith.mulf %144, %148 : vector<8x128xf32>
    %c40 = arith.constant 40 : index
    %c0_37 = arith.constant 0 : index
    %150 = vector.load %arg7[%c40, %c0_37] : memref<64x1024xf32, #tpu.memory_space<vmem>>, vector<8x512xf32>
    %cst_38 = arith.constant dense<0.000000e+00> : vector<8x512xf32>
    %151 = tpu.matmul %149, %0, %cst_38 {dimension_numbers = #tpu.dot_dimension_numbers<[1], [0], [0], [1], [0, 0, 1, 1], [], []>} : vector<8x128xf32>, vector<128x512xf32>, vector<8x512xf32> -> vector<8x512xf32>
    %152 = arith.addf %150, %151 : vector<8x512xf32>
    %153 = vector.extract_strided_slice %152 {offsets = [0, 0], sizes = [8, 128], strides = [1, 1]} : vector<8x512xf32> to vector<8x128xf32>
    %154 = arith.negf %153 : vector<8x128xf32>
    %155 = math.exp %154 : vector<8x128xf32>
    %cst_39 = arith.constant 1.000000e+00 : f32
    %156 = vector.broadcast %cst_39 : f32 to vector<8x128xf32>
    %157 = arith.addf %156, %155 : vector<8x128xf32>
    %158 = arith.divf %156, %157 : vector<8x128xf32>
    %159 = vector.extract_strided_slice %152 {offsets = [0, 128], sizes = [8, 128], strides = [1, 1]} : vector<8x512xf32> to vector<8x128xf32>
    %160 = arith.negf %159 : vector<8x128xf32>
    %161 = math.exp %160 : vector<8x128xf32>
    %cst_40 = arith.constant 1.000000e+00 : f32
    %162 = vector.broadcast %cst_40 : f32 to vector<8x128xf32>
    %163 = arith.addf %162, %161 : vector<8x128xf32>
    %164 = arith.divf %162, %163 : vector<8x128xf32>
    %165 = vector.extract_strided_slice %152 {offsets = [0, 256], sizes = [8, 128], strides = [1, 1]} : vector<8x512xf32> to vector<8x128xf32>
    %166 = math.tanh %165 : vector<8x128xf32>
    %167 = vector.extract_strided_slice %152 {offsets = [0, 384], sizes = [8, 128], strides = [1, 1]} : vector<8x512xf32> to vector<8x128xf32>
    %168 = arith.negf %167 : vector<8x128xf32>
    %169 = math.exp %168 : vector<8x128xf32>
    %cst_41 = arith.constant 1.000000e+00 : f32
    %170 = vector.broadcast %cst_41 : f32 to vector<8x128xf32>
    %171 = arith.addf %170, %169 : vector<8x128xf32>
    %172 = arith.divf %170, %171 : vector<8x128xf32>
    %173 = arith.mulf %164, %147 : vector<8x128xf32>
    %174 = arith.mulf %158, %166 : vector<8x128xf32>
    %175 = arith.addf %173, %174 : vector<8x128xf32>
    %176 = math.tanh %175 : vector<8x128xf32>
    %177 = arith.mulf %172, %176 : vector<8x128xf32>
    %c48 = arith.constant 48 : index
    %c0_42 = arith.constant 0 : index
    %178 = vector.load %arg7[%c48, %c0_42] : memref<64x1024xf32, #tpu.memory_space<vmem>>, vector<8x512xf32>
    %cst_43 = arith.constant dense<0.000000e+00> : vector<8x512xf32>
    %179 = tpu.matmul %177, %0, %cst_43 {dimension_numbers = #tpu.dot_dimension_numbers<[1], [0], [0], [1], [0, 0, 1, 1], [], []>} : vector<8x128xf32>, vector<128x512xf32>, vector<8x512xf32> -> vector<8x512xf32>
    %180 = arith.addf %178, %179 : vector<8x512xf32>
    %181 = vector.extract_strided_slice %180 {offsets = [0, 0], sizes = [8, 128], strides = [1, 1]} : vector<8x512xf32> to vector<8x128xf32>
    %182 = arith.negf %181 : vector<8x128xf32>
    %183 = math.exp %182 : vector<8x128xf32>
    %cst_44 = arith.constant 1.000000e+00 : f32
    %184 = vector.broadcast %cst_44 : f32 to vector<8x128xf32>
    %185 = arith.addf %184, %183 : vector<8x128xf32>
    %186 = arith.divf %184, %185 : vector<8x128xf32>
    %187 = vector.extract_strided_slice %180 {offsets = [0, 128], sizes = [8, 128], strides = [1, 1]} : vector<8x512xf32> to vector<8x128xf32>
    %188 = arith.negf %187 : vector<8x128xf32>
    %189 = math.exp %188 : vector<8x128xf32>
    %cst_45 = arith.constant 1.000000e+00 : f32
    %190 = vector.broadcast %cst_45 : f32 to vector<8x128xf32>
    %191 = arith.addf %190, %189 : vector<8x128xf32>
    %192 = arith.divf %190, %191 : vector<8x128xf32>
    %193 = vector.extract_strided_slice %180 {offsets = [0, 256], sizes = [8, 128], strides = [1, 1]} : vector<8x512xf32> to vector<8x128xf32>
    %194 = math.tanh %193 : vector<8x128xf32>
    %195 = vector.extract_strided_slice %180 {offsets = [0, 384], sizes = [8, 128], strides = [1, 1]} : vector<8x512xf32> to vector<8x128xf32>
    %196 = arith.negf %195 : vector<8x128xf32>
    %197 = math.exp %196 : vector<8x128xf32>
    %cst_46 = arith.constant 1.000000e+00 : f32
    %198 = vector.broadcast %cst_46 : f32 to vector<8x128xf32>
    %199 = arith.addf %198, %197 : vector<8x128xf32>
    %200 = arith.divf %198, %199 : vector<8x128xf32>
    %201 = arith.mulf %192, %175 : vector<8x128xf32>
    %202 = arith.mulf %186, %194 : vector<8x128xf32>
    %203 = arith.addf %201, %202 : vector<8x128xf32>
    %204 = math.tanh %203 : vector<8x128xf32>
    %205 = arith.mulf %200, %204 : vector<8x128xf32>
    %c56 = arith.constant 56 : index
    %c0_47 = arith.constant 0 : index
    %206 = vector.load %arg7[%c56, %c0_47] : memref<64x1024xf32, #tpu.memory_space<vmem>>, vector<8x512xf32>
    %cst_48 = arith.constant dense<0.000000e+00> : vector<8x512xf32>
    %207 = tpu.matmul %205, %0, %cst_48 {dimension_numbers = #tpu.dot_dimension_numbers<[1], [0], [0], [1], [0, 0, 1, 1], [], []>} : vector<8x128xf32>, vector<128x512xf32>, vector<8x512xf32> -> vector<8x512xf32>
    %208 = arith.addf %206, %207 : vector<8x512xf32>
    %209 = vector.extract_strided_slice %208 {offsets = [0, 0], sizes = [8, 128], strides = [1, 1]} : vector<8x512xf32> to vector<8x128xf32>
    %210 = arith.negf %209 : vector<8x128xf32>
    %211 = math.exp %210 : vector<8x128xf32>
    %cst_49 = arith.constant 1.000000e+00 : f32
    %212 = vector.broadcast %cst_49 : f32 to vector<8x128xf32>
    %213 = arith.addf %212, %211 : vector<8x128xf32>
    %214 = arith.divf %212, %213 : vector<8x128xf32>
    %215 = vector.extract_strided_slice %208 {offsets = [0, 128], sizes = [8, 128], strides = [1, 1]} : vector<8x512xf32> to vector<8x128xf32>
    %216 = arith.negf %215 : vector<8x128xf32>
    %217 = math.exp %216 : vector<8x128xf32>
    %cst_50 = arith.constant 1.000000e+00 : f32
    %218 = vector.broadcast %cst_50 : f32 to vector<8x128xf32>
    %219 = arith.addf %218, %217 : vector<8x128xf32>
    %220 = arith.divf %218, %219 : vector<8x128xf32>
    %221 = vector.extract_strided_slice %208 {offsets = [0, 256], sizes = [8, 128], strides = [1, 1]} : vector<8x512xf32> to vector<8x128xf32>
    %222 = math.tanh %221 : vector<8x128xf32>
    %223 = vector.extract_strided_slice %208 {offsets = [0, 384], sizes = [8, 128], strides = [1, 1]} : vector<8x512xf32> to vector<8x128xf32>
    %224 = arith.negf %223 : vector<8x128xf32>
    %225 = math.exp %224 : vector<8x128xf32>
    %cst_51 = arith.constant 1.000000e+00 : f32
    %226 = vector.broadcast %cst_51 : f32 to vector<8x128xf32>
    %227 = arith.addf %226, %225 : vector<8x128xf32>
    %228 = arith.divf %226, %227 : vector<8x128xf32>
    %229 = arith.mulf %220, %203 : vector<8x128xf32>
    %230 = arith.mulf %214, %222 : vector<8x128xf32>
    %231 = arith.addf %229, %230 : vector<8x128xf32>
    %232 = math.tanh %231 : vector<8x128xf32>
    %233 = arith.mulf %228, %232 : vector<8x128xf32>
    %c56_52 = arith.constant 56 : index
    %c512 = arith.constant 512 : index
    %234 = vector.load %arg7[%c56_52, %c512] : memref<64x1024xf32, #tpu.memory_space<vmem>>, vector<8x512xf32>
    %235 = vector.extract_strided_slice %234 {offsets = [0, 0], sizes = [8, 128], strides = [1, 1]} : vector<8x512xf32> to vector<8x128xf32>
    %236 = arith.negf %235 : vector<8x128xf32>
    %237 = math.exp %236 : vector<8x128xf32>
    %cst_53 = arith.constant 1.000000e+00 : f32
    %238 = vector.broadcast %cst_53 : f32 to vector<8x128xf32>
    %239 = arith.addf %238, %237 : vector<8x128xf32>
    %240 = arith.divf %238, %239 : vector<8x128xf32>
    %241 = vector.extract_strided_slice %234 {offsets = [0, 256], sizes = [8, 128], strides = [1, 1]} : vector<8x512xf32> to vector<8x128xf32>
    %242 = math.tanh %241 : vector<8x128xf32>
    %243 = vector.extract_strided_slice %234 {offsets = [0, 384], sizes = [8, 128], strides = [1, 1]} : vector<8x512xf32> to vector<8x128xf32>
    %244 = arith.negf %243 : vector<8x128xf32>
    %245 = math.exp %244 : vector<8x128xf32>
    %cst_54 = arith.constant 1.000000e+00 : f32
    %246 = vector.broadcast %cst_54 : f32 to vector<8x128xf32>
    %247 = arith.addf %246, %245 : vector<8x128xf32>
    %248 = arith.divf %246, %247 : vector<8x128xf32>
    %249 = arith.mulf %240, %242 : vector<8x128xf32>
    %250 = math.tanh %249 : vector<8x128xf32>
    %251 = arith.mulf %248, %250 : vector<8x128xf32>
    %252 = tpu.concatenate %233, %251 in 1 : vector<8x128xf32>, vector<8x128xf32> -> vector<8x256xf32>
    %c0_55 = arith.constant 0 : index
    %c0_56 = arith.constant 0 : index
    %253 = vector.load %arg4[%c0_55, %c0_56] : memref<256x128xf32, #tpu.memory_space<vmem>>, vector<256x128xf32>
    %cst_57 = arith.constant dense<0.000000e+00> : vector<8x128xf32>
    %254 = tpu.matmul %252, %253, %cst_57 {dimension_numbers = #tpu.dot_dimension_numbers<[1], [0], [0], [1], [0, 0, 1, 1], [], []>} : vector<8x256xf32>, vector<256x128xf32>, vector<8x128xf32> -> vector<8x128xf32>
    %c0_58 = arith.constant 0 : index
    %c0_59 = arith.constant 0 : index
    %255 = vector.load %arg5[%c0_58, %c0_59] : memref<1x128xf32, #tpu.memory_space<vmem>>, vector<1x128xf32>
    %256 = vector.broadcast %255 : vector<1x128xf32> to vector<8x128xf32>
    %257 = arith.addf %254, %256 : vector<8x128xf32>
    %c0_60 = arith.constant 0 : index
    %c0_61 = arith.constant 0 : index
    %258 = vector.load %arg6[%c0_60, %c0_61] : memref<8x128xf32, #tpu.memory_space<vmem>>, vector<8x128xf32>
    tpu.vector_store %arg6[%c0_60, %c0_61], %257 {strides = array<i32>} : memref<8x128xf32, #tpu.memory_space<vmem>>, vector<8x128xf32>,
    return
  }
}

</mosaic_0001>

<llo_original>
// kernel: tpu_custom_call.1
$region0: #{tpu_custom_call.1}
  #allocation0 [shape = 'u32[]', space=smem, size = 0x4, offset = 0x4, fixed_abs, tag = 'smem constant byte address 0x4 - core index']
  #allocation1 [shape = 'u32[144,128]{1,0:T(1,128)}', space=vmem, size = 0x12000, scoped, tag = 'internal scratch']
  #allocation2 [shape = 'f32[64,1024]{1,0:T(8,128)}', space=vmem, size = 0x40000, scoped, tag = 'scratch operand']
  %s0 = inlined_call_operand.vmem [shape: f32[64,26], index: 0, kind: input, shape index: {}]
  %s1 = inlined_call_operand.hbm [shape: f32[26,1024], index: 1, kind: input, shape index: {}]
  %s2 = inlined_call_operand.vmem [shape: f32[1,1024], index: 2, kind: input, shape index: {}]
  %s3 = inlined_call_operand.hbm [shape: f32[128,512], index: 3, kind: input, shape index: {}]
  %s4 = inlined_call_operand.hbm [shape: f32[256,128], index: 4, kind: input, shape index: {}]
  %s5 = inlined_call_operand.vmem [shape: f32[1,128], index: 5, kind: input, shape index: {}]
  %s6 = inlined_call_operand.hbm [shape: f32[8,128], index: 6, kind: output, shape index: {}]
  %s7 = sld [smem:[#allocation0]]
  $region46: #{tpu_custom_call.1} parent=0
    _
  %s9 = ssub.s32 1, %s7
  %s10 = scalar_select 0, %s9, %s7
  $region1: #{tpu_custom_call.1} parent=0
    #allocation3 [shape = 'u8[131072]{0}', space=vmem, size = 0x20000, scoped, tag = 'input window, operand 1, single buffered']
    #allocation4 [shape = 's32[1]{0}', space=sflag, size = 0x4, scoped, tag = 'scoped memory for tpu_custom_call.1']
    #allocation5 [shape = 's32[1]{0}', space=sflag, size = 0x4, scoped, tag = 'scoped memory for tpu_custom_call.1']
    #allocation6 [shape = 'u8[262144]{0}', space=vmem, size = 0x40000, scoped, tag = 'input window, operand 3, single buffered']
    #allocation7 [shape = 's32[1]{0}', space=sflag, size = 0x4, scoped, tag = 'scoped memory for tpu_custom_call.1']
    #allocation8 [shape = 'u8[131072]{0}', space=vmem, size = 0x20000, scoped, tag = 'input window, operand 4, single buffered']
    #allocation9 [shape = 'u8[4096]{0}', space=vmem, size = 0x1000, scoped, tag = 'output window, operand 0, single buffered']
    %11 = vsyncpa [#allocation4], 0
    %12 = vsyncpa [#allocation7], 0
    %13 = vsyncpa [#allocation5], 0
    // Predicated region
    $region2: #{tpu_custom_call.1} parent=1 // pred_check
      _
    $region3: #{tpu_custom_call.1} parent=1 // pred_check_branch
      %15 = sbr.rel (0) target = $region5
    $region4: #{tpu_custom_call.1} parent=1 // pred_region
      _
    $region5: #{tpu_custom_call.1} parent=1 // pred_fallthru
      _
    // Predicated region
    $region6: #{tpu_custom_call.1} parent=1 // pred_check
      _
    $region7: #{tpu_custom_call.1} parent=1 // pred_check_branch
      %17 = sbr.rel (0) target = $region9
    $region8: #{tpu_custom_call.1} parent=1 // pred_region
      %s19 = ssub.s32 4096, 4096
      %20 = vsyncadd [#allocation4], %s19
      %s21 = sshll.u32 [#allocation3], 4
      %s22 = int_to_ptr.vmem [resolvable:$true] %s21
      %27 = dma.hbm_to_vmem [thread:$0]  %s1, 4096, %s22, [#allocation4], 1024, 1024, 64
    $region9: #{tpu_custom_call.1} parent=1 // pred_fallthru
      _
    // Predicated region
    $region10: #{tpu_custom_call.1} parent=1 // pred_check
      _
    $region11: #{tpu_custom_call.1} parent=1 // pred_check_branch
      %29 = sbr.rel (0) target = $region13
    $region12: #{tpu_custom_call.1} parent=1 // pred_region
      _
    $region13: #{tpu_custom_call.1} parent=1 // pred_fallthru
      _
    // Predicated region
    $region14: #{tpu_custom_call.1} parent=1 // pred_check
      _
    $region15: #{tpu_custom_call.1} parent=1 // pred_check_branch
      %31 = sbr.rel (0) target = $region17
    $region16: #{tpu_custom_call.1} parent=1 // pred_region
      %s33 = ssub.s32 8192, 8192
      %34 = vsyncadd [#allocation7], %s33
      %s35 = sshll.u32 [#allocation6], 4
      %s36 = int_to_ptr.vmem [resolvable:$true] %s35
      %41 = dma.hbm_to_vmem [thread:$0]  %s3, 8192, %s36, [#allocation7], 512, 512, 32
    $region17: #{tpu_custom_call.1} parent=1 // pred_fallthru
      _
    // Predicated region
    $region18: #{tpu_custom_call.1} parent=1 // pred_check
      _
    $region19: #{tpu_custom_call.1} parent=1 // pred_check_branch
      %43 = sbr.rel (0) target = $region21
    $region20: #{tpu_custom_call.1} parent=1 // pred_region
      %s45 = ssub.s32 4096, 4096
      %46 = vsyncadd [#allocation7], %s45
      %s47 = sshll.u32 [#allocation8], 4
      %s48 = int_to_ptr.vmem [resolvable:$true] %s47
      %53 = dma.hbm_to_vmem [thread:$0]  %s4, 4096, %s48, [#allocation7], 128, 128, 8
    $region21: #{tpu_custom_call.1} parent=1 // pred_fallthru
      _
    // Predicated region
    $region22: #{tpu_custom_call.1} parent=1 // pred_check
      _
    $region23: #{tpu_custom_call.1} parent=1 // pred_check_branch
      %55 = sbr.rel (0) target = $region25
    $region24: #{tpu_custom_call.1} parent=1 // pred_region
      _
    $region25: #{tpu_custom_call.1} parent=1 // pred_fallthru
      _
    // Predicated region
    $region26: #{tpu_custom_call.1} parent=1 // pred_check
      _
    $region27: #{tpu_custom_call.1} parent=1 // pred_check_branch
      %57 = sbr.rel (0) target = $region29
    $region28: #{tpu_custom_call.1} parent=1 // pred_region
      %58 = dma.done [#allocation4], 4096
    $region29: #{tpu_custom_call.1} parent=1 // pred_fallthru
      _
    // Predicated region
    $region30: #{tpu_custom_call.1} parent=1 // pred_check
      _
    $region31: #{tpu_custom_call.1} parent=1 // pred_check_branch
      %60 = sbr.rel (0) target = $region33
    $region32: #{tpu_custom_call.1} parent=1 // pred_region
      %61 = dma.done [#allocation7], 8192
    $region33: #{tpu_custom_call.1} parent=1 // pred_fallthru
      _
    // Predicated region
    $region34: #{tpu_custom_call.1} parent=1 // pred_check
      _
    $region35: #{tpu_custom_call.1} parent=1 // pred_check_branch
      %63 = sbr.rel (0) target = $region37
    $region36: #{tpu_custom_call.1} parent=1 // pred_region
      %64 = dma.done [#allocation7], 4096
    $region37: #{tpu_custom_call.1} parent=1 // pred_fallthru
      _
    %v65 = vld [vmem:[#allocation6] sm:$0xff]
    %v66 = vld [vmem:[#allocation6 + $0x8] sm:$0xff]
    %v67 = vld [vmem:[#allocation6 + $0x10] sm:$0xff]
    %v68 = vld [vmem:[#allocation6 + $0x18] sm:$0xff]
    %v69 = vld [vmem:[#allocation6 + $0x20] sm:$0xff]
    %v70 = vld [vmem:[#allocation6 + $0x28] sm:$0xff]
    %v71 = vld [vmem:[#allocation6 + $0x30] sm:$0xff]
    %v72 = vld [vmem:[#allocation6 + $0x38] sm:$0xff]
    %v73 = vld [vmem:[#allocation6 + $0x40] sm:$0xff]
    %v74 = vld [vmem:[#allocation6 + $0x48] sm:$0xff]
    %v75 = vld [vmem:[#allocation6 + $0x50] sm:$0xff]
    %v76 = vld [vmem:[#allocation6 + $0x58] sm:$0xff]
    %v77 = vld [vmem:[#allocation6 + $0x60] sm:$0xff]
    %v78 = vld [vmem:[#allocation6 + $0x68] sm:$0xff]
    %v79 = vld [vmem:[#allocation6 + $0x70] sm:$0xff]
    %v80 = vld [vmem:[#allocation6 + $0x78] sm:$0xff]
    %v81 = vld [vmem:[#allocation6 + $0x80] sm:$0xff]
    %v82 = vld [vmem:[#allocation6 + $0x88] sm:$0xff]
    %v83 = vld [vmem:[#allocation6 + $0x90] sm:$0xff]
    %v84 = vld [vmem:[#allocation6 + $0x98] sm:$0xff]
    %v85 = vld [vmem:[#allocation6 + $0xa0] sm:$0xff]
    %v86 = vld [vmem:[#allocation6 + $0xa8] sm:$0xff]
    %v87 = vld [vmem:[#allocation6 + $0xb0] sm:$0xff]
    %v88 = vld [vmem:[#allocation6 + $0xb8] sm:$0xff]
    %v89 = vld [vmem:[#allocation6 + $0xc0] sm:$0xff]
    %v90 = vld [vmem:[#allocation6 + $0xc8] sm:$0xff]
    %v91 = vld [vmem:[#allocation6 + $0xd0] sm:$0xff]
    %v92 = vld [vmem:[#allocation6 + $0xd8] sm:$0xff]
    %v93 = vld [vmem:[#allocation6 + $0xe0] sm:$0xff]
    %v94 = vld [vmem:[#allocation6 + $0xe8] sm:$0xff]
    %v95 = vld [vmem:[#allocation6 + $0xf0] sm:$0xff]
    %v96 = vld [vmem:[#allocation6 + $0xf8] sm:$0xff]
    %v97 = vld [vmem:[#allocation6 + $0x100] sm:$0xff]
    %v98 = vld [vmem:[#allocation6 + $0x108] sm:$0xff]
    %v99 = vld [vmem:[#allocation6 + $0x110] sm:$0xff]
    %v100 = vld [vmem:[#allocation6 + $0x118] sm:$0xff]
    %v101 = vld [vmem:[#allocation6 + $0x120] sm:$0xff]
    %v102 = vld [vmem:[#allocation6 + $0x128] sm:$0xff]
    %v103 = vld [vmem:[#allocation6 + $0x130] sm:$0xff]
    %v104 = vld [vmem:[#allocation6 + $0x138] sm:$0xff]
    %v105 = vld [vmem:[#allocation6 + $0x140] sm:$0xff]
    %v106 = vld [vmem:[#allocation6 + $0x148] sm:$0xff]
    %v107 = vld [vmem:[#allocation6 + $0x150] sm:$0xff]
    %v108 = vld [vmem:[#allocation6 + $0x158] sm:$0xff]
    %v109 = vld [vmem:[#allocation6 + $0x160] sm:$0xff]
    %v110 = vld [vmem:[#allocation6 + $0x168] sm:$0xff]
    %v111 = vld [vmem:[#allocation6 + $0x170] sm:$0xff]
    %v112 = vld [vmem:[#allocation6 + $0x178] sm:$0xff]
    %v113 = vld [vmem:[#allocation6 + $0x180] sm:$0xff]
    %v114 = vld [vmem:[#allocation6 + $0x188] sm:$0xff]
    %v115 = vld [vmem:[#allocation6 + $0x190] sm:$0xff]
    %v116 = vld [vmem:[#allocation6 + $0x198] sm:$0xff]
    %v117 = vld [vmem:[#allocation6 + $0x1a0] sm:$0xff]
    %v118 = vld [vmem:[#allocation6 + $0x1a8] sm:$0xff]
    %v119 = vld [vmem:[#allocation6 + $0x1b0] sm:$0xff]
    %v120 = vld [vmem:[#allocation6 + $0x1b8] sm:$0xff]
    %v121 = vld [vmem:[#allocation6 + $0x1c0] sm:$0xff]
    %v122 = vld [vmem:[#allocation6 + $0x1c8] sm:$0xff]
    %v123 = vld [vmem:[#allocation6 + $0x1d0] sm:$0xff]
    %v124 = vld [vmem:[#allocation6 + $0x1d8] sm:$0xff]
    %v125 = vld [vmem:[#allocation6 + $0x1e0] sm:$0xff]
    %v126 = vld [vmem:[#allocation6 + $0x1e8] sm:$0xff]
    %v127 = vld [vmem:[#allocation6 + $0x1f0] sm:$0xff]
    %v128 = vld [vmem:[#allocation6 + $0x1f8] sm:$0xff]
    %v129 = vld [vmem:[%s0] sm:$0xff]
    %v130 = vld [vmem:[%s0 + $0x8] sm:$0xff]
    %v131 = vld [vmem:[%s0 + $0x10] sm:$0xff]
    %v132 = vld [vmem:[%s0 + $0x18] sm:$0xff]
    %v133 = vld [vmem:[%s0 + $0x20] sm:$0xff]
    %v134 = vld [vmem:[%s0 + $0x28] sm:$0xff]
    %v135 = vld [vmem:[%s0 + $0x30] sm:$0xff]
    %v136 = vld [vmem:[%s0 + $0x38] sm:$0xff]
    %v137 = vld [vmem:[#allocation3] sm:$0xff]
    %v138 = vld [vmem:[#allocation3 + $0x8] sm:$0xff]
    %v139 = vld [vmem:[#allocation3 + $0x10] sm:$0xff]
    %v140 = vld [vmem:[#allocation3 + $0x18] sm:$0xff]
    %v141 = vld [vmem:[#allocation3 + $0x20] sm:$0xff]
    %v142 = vld [vmem:[#allocation3 + $0x28] sm:$0xff]
    %v143 = vld [vmem:[#allocation3 + $0x30] sm:$0xff]
    %v144 = vld [vmem:[#allocation3 + $0x38] sm:$0xff]
    %v145 = vld [vmem:[#allocation3 + $0x40] sm:$0xff]
    %v146 = vld [vmem:[#allocation3 + $0x48] sm:$0xff]
    %v147 = vld [vmem:[#allocation3 + $0x50] sm:$0xff]
    %v148 = vld [vmem:[#allocation3 + $0x58] sm:$0xff]
    %v149 = vld [vmem:[#allocation3 + $0x60] sm:$0xff]
    %v150 = vld [vmem:[#allocation3 + $0x68] sm:$0xff]
    %v151 = vld [vmem:[#allocation3 + $0x70] sm:$0xff]
    %v152 = vld [vmem:[#allocation3 + $0x78] sm:$0xff]
    %v153 = vld [vmem:[#allocation3 + $0x80] sm:$0xff]
    %v154 = vld [vmem:[#allocation3 + $0x88] sm:$0xff]
    %v155 = vld [vmem:[#allocation3 + $0x90] sm:$0xff]
    %v156 = vld [vmem:[#allocation3 + $0x98] sm:$0xff]
    %v157 = vld [vmem:[#allocation3 + $0xa0] sm:$0xff]
    %v158 = vld [vmem:[#allocation3 + $0xa8] sm:$0xff]
    %v159 = vld [vmem:[#allocation3 + $0xb0] sm:$0xff]
    %v160 = vld [vmem:[#allocation3 + $0xb8] sm:$0xff]
    %v161 = vld [vmem:[#allocation3 + $0xc0] sm:$0x3]
    %v162 = vld [vmem:[#allocation3 + $0xc8] sm:$0x3]
    %v163 = vld [vmem:[#allocation3 + $0xd0] sm:$0x3]
    %v164 = vld [vmem:[#allocation3 + $0xd8] sm:$0x3]
    %v165 = vld [vmem:[#allocation3 + $0xe0] sm:$0x3]
    %v166 = vld [vmem:[#allocation3 + $0xe8] sm:$0x3]
    %v167 = vld [vmem:[#allocation3 + $0xf0] sm:$0x3]
    %v168 = vld [vmem:[#allocation3 + $0xf8] sm:$0x3]
    %v169 = vld [vmem:[%s2] sm:$0xff]
    %v171 = vlaneseq
    %v172 = vshrl.u32 %v171, 7
    %v173 = vsub.s32 0, %v172
    %v174 = vrot.slane %v169, %v173
    %v175 = vlaneseq
    %v176 = vshrl.u32 %v175, 7
    %v177 = vsub.s32 1, %v176
    %v178 = vrot.slane %v169, %v177
    %v179 = vlaneseq
    %v180 = vshrl.u32 %v179, 7
    %v181 = vsub.s32 2, %v180
    %v182 = vrot.slane %v169, %v181
    %v183 = vlaneseq
    %v184 = vshrl.u32 %v183, 7
    %v185 = vsub.s32 3, %v184
    %v186 = vrot.slane %v169, %v185
    %v187 = vlaneseq
    %v188 = vshrl.u32 %v187, 7
    %v189 = vsub.s32 4, %v188
    %v190 = vrot.slane %v169, %v189
    %v191 = vlaneseq
    %v192 = vshrl.u32 %v191, 7
    %v193 = vsub.s32 5, %v192
    %v194 = vrot.slane %v169, %v193
    %v195 = vlaneseq
    %v196 = vshrl.u32 %v195, 7
    %v197 = vsub.s32 6, %v196
    %v198 = vrot.slane %v169, %v197
    %v199 = vlaneseq
    %v200 = vshrl.u32 %v199, 7
    %v201 = vsub.s32 7, %v200
    %v202 = vrot.slane %v169, %v201
    %vm211 = vcmask 211968
    %v213 = vsel %vm211, %v129, 0
    %v216 = vsel %vm211, %v130, 0
    %v219 = vsel %vm211, %v131, 0
    %v222 = vsel %vm211, %v132, 0
    %v225 = vsel %vm211, %v133, 0
    %v228 = vsel %vm211, %v134, 0
    %v231 = vsel %vm211, %v135, 0
    %v234 = vsel %vm211, %v136, 0
    %vm236 = vcmask 1041408
    %v238 = vsel %vm236, %v161, 0
    %v241 = vsel %vm236, %v162, 0
    %v244 = vsel %vm236, %v163, 0
    %v247 = vsel %vm236, %v164, 0
    %v250 = vsel %vm236, %v165, 0
    %v253 = vsel %vm236, %v166, 0
    %v256 = vsel %vm236, %v167, 0
    %v259 = vsel %vm236, %v168, 0
    %261 = vmatprep.subr.mxu0 %v138
    %262 = vmatpush1.msra.mxu0 %v137
    %263 = vmatprep.subr.mxu0 %v146
    %264 = vmatpush1.msra.mxu0 %v145
    %265 = vmatprep.subr.mxu0 %v154
    %266 = vmatpush1.msra.mxu0 %v153
    %267 = vmatprep.subr.mxu0 %v241
    %268 = vmatpush1.msra.mxu0 %v238
    %269 = vmatprep.subr.mxu0 0.0
    %270 = vmatpush1.msra.mxu0 0.0
    %271 = vmatprep.subr.mxu0 0.0
    %272 = vmatpush1.msra.mxu0 0.0
    %273 = vmatprep.subr.mxu0 0.0
    %274 = vmatpush1.msra.mxu0 0.0
    %275 = vmatprep.subr.mxu0 0.0
    %276 = vmatpush1.msra.mxu0 0.0
    %277 = vmatprep.subr.mxu0 0.0
    %278 = vmatpush1.msra.mxu0 0.0
    %279 = vmatprep.subr.mxu0 0.0
    %280 = vmatpush1.msra.mxu0 0.0
    %281 = vmatprep.subr.mxu0 0.0
    %282 = vmatpush1.msra.mxu0 0.0
    %283 = vmatprep.subr.mxu0 0.0
    %284 = vmatpush1.msra.mxu0 0.0
    %285 = vmatprep.subr.mxu0 0.0
    %286 = vmatpush1.msra.mxu0 0.0
    %287 = vmatprep.subr.mxu0 0.0
    %288 = vmatpush1.msra.mxu0 0.0
    %289 = vmatprep.subr.mxu0 0.0
    %290 = vmatpush1.msra.mxu0 0.0
    %291 = vmatprep.subr.mxu0 0.0
    %292 = vmatpush1.msra.mxu0 0.0
    %293 = vmatprep.subr.mxu0 0.0
    %294 = vmatpush1.msra.mxu0 0.0
    %295 = vmatprep.subr.mxu0 0.0
    %296 = vmatpush1.msra.mxu0 0.0
    %297 = vmatprep.subr.mxu0 0.0
    %298 = vmatpush1.msra.mxu0 0.0
    %299 = vmatprep.subr.mxu0 0.0
    %300 = vmatpush1.msra.mxu0 0.0
    %301 = vmatprep.subr.mxu0 0.0
    %302 = vmatpush1.msra.mxu0 0.0
    %303 = vmatprep.subr.mxu0 0.0
    %304 = vmatpush1.msra.mxu0 0.0
    %305 = vmatprep.subr.mxu0 0.0
    %306 = vmatpush1.msra.mxu0 0.0
    %307 = vmatprep.subr.mxu0 0.0
    %308 = vmatpush1.msra.mxu0 0.0
    %309 = vmatprep.subr.mxu0 0.0
    %310 = vmatpush1.msra.mxu0 0.0
    %311 = vmatprep.subr.mxu0 0.0
    %312 = vmatpush1.msra.mxu0 0.0
    %313 = vmatprep.subr.mxu0 0.0
    %314 = vmatpush1.msra.mxu0 0.0
    %315 = vmatprep.subr.mxu0 0.0
    %316 = vmatpush1.msra.mxu0 0.0
    %317 = vmatprep.subr.mxu0 0.0
    %318 = vmatpush1.msra.mxu0 0.0
    %319 = vmatprep.subr.mxu0 0.0
    %320 = vmatpush1.msra.mxu0 0.0
    %321 = vmatprep.subr.mxu0 0.0
    %322 = vmatpush1.msra.mxu0 0.0
    %323 = vmatprep.subr.mxu0 0.0
    %324 = vmatpush1.msra.mxu0 0.0
    %325 = vmatprep.mubr.f32.mxu0 0.0
    %326 = vmatmul.mubr.f32.gmra.mrb[0].mxu0 %v213
    %v327 = vpop.f32.mrb[0].mxu0
    %v328 = vadd.f32 %v174, %v327
    %v329 = vpop.f32.mrb[0].mxu0
    %v330 = vadd.f32 %v178, %v329
    %331 = vmatprep.mubr.f32.mxu0 0.0
    %332 = vmatmul.mubr.f32.gmra.mrb[0].mxu0 %v216
    %v333 = vpop.f32.mrb[0].mxu0
    %v334 = vadd.f32 %v174, %v333
    %v335 = vpop.f32.mrb[0].mxu0
    %v336 = vadd.f32 %v178, %v335
    %337 = vmatprep.mubr.f32.mxu0 0.0
    %338 = vmatmul.mubr.f32.gmra.mrb[0].mxu0 %v219
    %v339 = vpop.f32.mrb[0].mxu0
    %v340 = vadd.f32 %v174, %v339
    %v341 = vpop.f32.mrb[0].mxu0
    %v342 = vadd.f32 %v178, %v341
    %343 = vmatprep.mubr.f32.mxu0 0.0
    %344 = vmatmul.mubr.f32.gmra.mrb[0].mxu0 %v222
    %v345 = vpop.f32.mrb[0].mxu0
    %v346 = vadd.f32 %v174, %v345
    %v347 = vpop.f32.mrb[0].mxu0
    %v348 = vadd.f32 %v178, %v347
    %349 = vmatprep.mubr.f32.mxu0 0.0
    %350 = vmatmul.mubr.f32.gmra.mrb[0].mxu0 %v225
    %v351 = vpop.f32.mrb[0].mxu0
    %v352 = vadd.f32 %v174, %v351
    %v353 = vpop.f32.mrb[0].mxu0
    %v354 = vadd.f32 %v178, %v353
    %355 = vmatprep.mubr.f32.mxu0 0.0
    %356 = vmatmul.mubr.f32.gmra.mrb[0].mxu0 %v228
    %v357 = vpop.f32.mrb[0].mxu0
    %v358 = vadd.f32 %v174, %v357
    %v359 = vpop.f32.mrb[0].mxu0
    %v360 = vadd.f32 %v178, %v359
    %361 = vmatprep.mubr.f32.mxu0 0.0
    %362 = vmatmul.mubr.f32.gmra.mrb[0].mxu0 %v231
    %v363 = vpop.f32.mrb[0].mxu0
    %v364 = vadd.f32 %v174, %v363
    %v365 = vpop.f32.mrb[0].mxu0
    %v366 = vadd.f32 %v178, %v365
    %367 = vmatprep.mubr.f32.mxu0 0.0
    %368 = vmatmul.mubr.f32.gmra.mrb[0].mxu0 %v234
    %v369 = vpop.f32.mrb[0].mxu0
    %v370 = vadd.f32 %v174, %v369
    %v371 = vpop.f32.mrb[0].mxu0
    %v372 = vadd.f32 %v178, %v371
    %373 = vdwg.mxu0
    %374 = vmatprep.subr.mxu0 %v140
    %375 = vmatpush1.msra.mxu0 %v139
    %376 = vmatprep.subr.mxu0 %v148
    %377 = vmatpush1.msra.mxu0 %v147
    %378 = vmatprep.subr.mxu0 %v156
    %379 = vmatpush1.msra.mxu0 %v155
    %380 = vmatprep.subr.mxu0 %v247
    %381 = vmatpush1.msra.mxu0 %v244
    %382 = vmatprep.subr.mxu0 0.0
    %383 = vmatpush1.msra.mxu0 0.0
    %384 = vmatprep.subr.mxu0 0.0
    %385 = vmatpush1.msra.mxu0 0.0
    %386 = vmatprep.subr.mxu0 0.0
    %387 = vmatpush1.msra.mxu0 0.0
    %388 = vmatprep.subr.mxu0 0.0
    %389 = vmatpush1.msra.mxu0 0.0
    %390 = vmatprep.subr.mxu0 0.0
    %391 = vmatpush1.msra.mxu0 0.0
    %392 = vmatprep.subr.mxu0 0.0
    %393 = vmatpush1.msra.mxu0 0.0
    %394 = vmatprep.subr.mxu0 0.0
    %395 = vmatpush1.msra.mxu0 0.0
    %396 = vmatprep.subr.mxu0 0.0
    %397 = vmatpush1.msra.mxu0 0.0
    %398 = vmatprep.subr.mxu0 0.0
    %399 = vmatpush1.msra.mxu0 0.0
    %400 = vmatprep.subr.mxu0 0.0
    %401 = vmatpush1.msra.mxu0 0.0
    %402 = vmatprep.subr.mxu0 0.0
    %403 = vmatpush1.msra.mxu0 0.0
    %404 = vmatprep.subr.mxu0 0.0
    %405 = vmatpush1.msra.mxu0 0.0
    %406 = vmatprep.subr.mxu0 0.0
    %407 = vmatpush1.msra.mxu0 0.0
    %408 = vmatprep.subr.mxu0 0.0
    %409 = vmatpush1.msra.mxu0 0.0
    %410 = vmatprep.subr.mxu0 0.0
    %411 = vmatpush1.msra.mxu0 0.0
    %412 = vmatprep.subr.mxu0 0.0
    %413 = vmatpush1.msra.mxu0 0.0
    %414 = vmatprep.subr.mxu0 0.0
    %415 = vmatpush1.msra.mxu0 0.0
    %416 = vmatprep.subr.mxu0 0.0
    %417 = vmatpush1.msra.mxu0 0.0
    %418 = vmatprep.subr.mxu0 0.0
    %419 = vmatpush1.msra.mxu0 0.0
    %420 = vmatprep.subr.mxu0 0.0
    %421 = vmatpush1.msra.mxu0 0.0
    %422 = vmatprep.subr.mxu0 0.0
    %423 = vmatpush1.msra.mxu0 0.0
    %424 = vmatprep.subr.mxu0 0.0
    %425 = vmatpush1.msra.mxu0 0.0
    %426 = vmatprep.subr.mxu0 0.0
    %427 = vmatpush1.msra.mxu0 0.0
    %428 = vmatprep.subr.mxu0 0.0
    %429 = vmatpush1.msra.mxu0 0.0
    %430 = vmatprep.subr.mxu0 0.0
    %431 = vmatpush1.msra.mxu0 0.0
    %432 = vmatprep.subr.mxu0 0.0
    %433 = vmatpush1.msra.mxu0 0.0
    %434 = vmatprep.subr.mxu0 0.0
    %435 = vmatpush1.msra.mxu0 0.0
    %436 = vmatprep.subr.mxu0 0.0
    %437 = vmatpush1.msra.mxu0 0.0
    %438 = vmatprep.mubr.f32.mxu0 0.0
    %439 = vmatmul.mubr.f32.gmra.mrb[0].mxu0 %v213
    %v440 = vpop.f32.mrb[0].mxu0
    %v441 = vadd.f32 %v182, %v440
    %v442 = vpop.f32.mrb[0].mxu0
    %v443 = vadd.f32 %v186, %v442
    %444 = vmatprep.mubr.f32.mxu0 0.0
    %445 = vmatmul.mubr.f32.gmra.mrb[0].mxu0 %v216
    %v446 = vpop.f32.mrb[0].mxu0
    %v447 = vadd.f32 %v182, %v446
    %v448 = vpop.f32.mrb[0].mxu0
    %v449 = vadd.f32 %v186, %v448
    %450 = vmatprep.mubr.f32.mxu0 0.0
    %451 = vmatmul.mubr.f32.gmra.mrb[0].mxu0 %v219
    %v452 = vpop.f32.mrb[0].mxu0
    %v453 = vadd.f32 %v182, %v452
    %v454 = vpop.f32.mrb[0].mxu0
    %v455 = vadd.f32 %v186, %v454
    %456 = vmatprep.mubr.f32.mxu0 0.0
    %457 = vmatmul.mubr.f32.gmra.mrb[0].mxu0 %v222
    %v458 = vpop.f32.mrb[0].mxu0
    %v459 = vadd.f32 %v182, %v458
    %v460 = vpop.f32.mrb[0].mxu0
    %v461 = vadd.f32 %v186, %v460
    %462 = vmatprep.mubr.f32.mxu0 0.0
    %463 = vmatmul.mubr.f32.gmra.mrb[0].mxu0 %v225
    %v464 = vpop.f32.mrb[0].mxu0
    %v465 = vadd.f32 %v182, %v464
    %v466 = vpop.f32.mrb[0].mxu0
    %v467 = vadd.f32 %v186, %v466
    %468 = vmatprep.mubr.f32.mxu0 0.0
    %469 = vmatmul.mubr.f32.gmra.mrb[0].mxu0 %v228
    %v470 = vpop.f32.mrb[0].mxu0
    %v471 = vadd.f32 %v182, %v470
    %v472 = vpop.f32.mrb[0].mxu0
    %v473 = vadd.f32 %v186, %v472
    %474 = vmatprep.mubr.f32.mxu0 0.0
    %475 = vmatmul.mubr.f32.gmra.mrb[0].mxu0 %v231
    %v476 = vpop.f32.mrb[0].mxu0
    %v477 = vadd.f32 %v182, %v476
    %v478 = vpop.f32.mrb[0].mxu0
    %v479 = vadd.f32 %v186, %v478
    %480 = vmatprep.mubr.f32.mxu0 0.0
    %481 = vmatmul.mubr.f32.gmra.mrb[0].mxu0 %v234
    %v482 = vpop.f32.mrb[0].mxu0
    %v483 = vadd.f32 %v182, %v482
    %v484 = vpop.f32.mrb[0].mxu0
    %v485 = vadd.f32 %v186, %v484
    %486 = vdwg.mxu0
    %487 = vmatprep.subr.mxu0 %v142
    %488 = vmatpush1.msra.mxu0 %v141
    %489 = vmatprep.subr.mxu0 %v150
    %490 = vmatpush1.msra.mxu0 %v149
    %491 = vmatprep.subr.mxu0 %v158
    %492 = vmatpush1.msra.mxu0 %v157
    %493 = vmatprep.subr.mxu0 %v253
    %494 = vmatpush1.msra.mxu0 %v250
    %495 = vmatprep.subr.mxu0 0.0
    %496 = vmatpush1.msra.mxu0 0.0
    %497 = vmatprep.subr.mxu0 0.0
    %498 = vmatpush1.msra.mxu0 0.0
    %499 = vmatprep.subr.mxu0 0.0
    %500 = vmatpush1.msra.mxu0 0.0
    %501 = vmatprep.subr.mxu0 0.0
    %502 = vmatpush1.msra.mxu0 0.0
    %503 = vmatprep.subr.mxu0 0.0
    %504 = vmatpush1.msra.mxu0 0.0
    %505 = vmatprep.subr.mxu0 0.0
    %506 = vmatpush1.msra.mxu0 0.0
    %507 = vmatprep.subr.mxu0 0.0
    %508 = vmatpush1.msra.mxu0 0.0
    %509 = vmatprep.subr.mxu0 0.0
    %510 = vmatpush1.msra.mxu0 0.0
    %511 = vmatprep.subr.mxu0 0.0
    %512 = vmatpush1.msra.mxu0 0.0
    %513 = vmatprep.subr.mxu0 0.0
    %514 = vmatpush1.msra.mxu0 0.0
    %515 = vmatprep.subr.mxu0 0.0
    %516 = vmatpush1.msra.mxu0 0.0
    %517 = vmatprep.subr.mxu0 0.0
    %518 = vmatpush1.msra.mxu0 0.0
    %519 = vmatprep.subr.mxu0 0.0
    %520 = vmatpush1.msra.mxu0 0.0
    %521 = vmatprep.subr.mxu0 0.0
    %522 = vmatpush1.msra.mxu0 0.0
    %523 = vmatprep.subr.mxu0 0.0
    %524 = vmatpush1.msra.mxu0 0.0
    %525 = vmatprep.subr.mxu0 0.0
    %526 = vmatpush1.msra.mxu0 0.0
    %527 = vmatprep.subr.mxu0 0.0
    %528 = vmatpush1.msra.mxu0 0.0
    %529 = vmatprep.subr.mxu0 0.0
    %530 = vmatpush1.msra.mxu0 0.0
    %531 = vmatprep.subr.mxu0 0.0
    %532 = vmatpush1.msra.mxu0 0.0
    %533 = vmatprep.subr.mxu0 0.0
    %534 = vmatpush1.msra.mxu0 0.0
    %535 = vmatprep.subr.mxu0 0.0
    %536 = vmatpush1.msra.mxu0 0.0
    %537 = vmatprep.subr.mxu0 0.0
    %538 = vmatpush1.msra.mxu0 0.0
    %539 = vmatprep.subr.mxu0 0.0
    %540 = vmatpush1.msra.mxu0 0.0
    %541 = vmatprep.subr.mxu0 0.0
    %542 = vmatpush1.msra.mxu0 0.0
    %543 = vmatprep.subr.mxu0 0.0
    %544 = vmatpush1.msra.mxu0 0.0
    %545 = vmatprep.subr.mxu0 0.0
    %546 = vmatpush1.msra.mxu0 0.0
    %547 = vmatprep.subr.mxu0 0.0
    %548 = vmatpush1.msra.mxu0 0.0
    %549 = vmatprep.subr.mxu0 0.0
    %550 = vmatpush1.msra.mxu0 0.0
    %551 = vmatprep.mubr.f32.mxu0 0.0
    %552 = vmatmul.mubr.f32.gmra.mrb[0].mxu0 %v213
    %v553 = vpop.f32.mrb[0].mxu0
    %v554 = vadd.f32 %v190, %v553
    %v555 = vpop.f32.mrb[0].mxu0
    %v556 = vadd.f32 %v194, %v555
    %557 = vmatprep.mubr.f32.mxu0 0.0
    %558 = vmatmul.mubr.f32.gmra.mrb[0].mxu0 %v216
    %v559 = vpop.f32.mrb[0].mxu0
    %v560 = vadd.f32 %v190, %v559
    %v561 = vpop.f32.mrb[0].mxu0
    %v562 = vadd.f32 %v194, %v561
    %563 = vmatprep.mubr.f32.mxu0 0.0
    %564 = vmatmul.mubr.f32.gmra.mrb[0].mxu0 %v219
    %v565 = vpop.f32.mrb[0].mxu0
    %v566 = vadd.f32 %v190, %v565
    %v567 = vpop.f32.mrb[0].mxu0
    %v568 = vadd.f32 %v194, %v567
    %569 = vmatprep.mubr.f32.mxu0 0.0
    %570 = vmatmul.mubr.f32.gmra.mrb[0].mxu0 %v222
    %v571 = vpop.f32.mrb[0].mxu0
    %v572 = vadd.f32 %v190, %v571
    %v573 = vpop.f32.mrb[0].mxu0
    %v574 = vadd.f32 %v194, %v573
    %575 = vmatprep.mubr.f32.mxu0 0.0
    %576 = vmatmul.mubr.f32.gmra.mrb[0].mxu0 %v225
    %v577 = vpop.f32.mrb[0].mxu0
    %v578 = vadd.f32 %v190, %v577
    %v579 = vpop.f32.mrb[0].mxu0
    %v580 = vadd.f32 %v194, %v579
    %581 = vmatprep.mubr.f32.mxu0 0.0
    %582 = vmatmul.mubr.f32.gmra.mrb[0].mxu0 %v228
    %v583 = vpop.f32.mrb[0].mxu0
    %v584 = vadd.f32 %v190, %v583
    %v585 = vpop.f32.mrb[0].mxu0
    %v586 = vadd.f32 %v194, %v585
    %587 = vmatprep.mubr.f32.mxu0 0.0
    %588 = vmatmul.mubr.f32.gmra.mrb[0].mxu0 %v231
    %v589 = vpop.f32.mrb[0].mxu0
    %v590 = vadd.f32 %v190, %v589
    %v591 = vpop.f32.mrb[0].mxu0
    %v592 = vadd.f32 %v194, %v591
    %593 = vmatprep.mubr.f32.mxu0 0.0
    %594 = vmatmul.mubr.f32.gmra.mrb[0].mxu0 %v234
    %v595 = vpop.f32.mrb[0].mxu0
    %v596 = vadd.f32 %v190, %v595
    %v597 = vpop.f32.mrb[0].mxu0
    %v598 = vadd.f32 %v194, %v597
    %599 = vdwg.mxu0
    %600 = vmatprep.subr.mxu0 %v144
    %601 = vmatpush1.msra.mxu0 %v143
    %602 = vmatprep.subr.mxu0 %v152
    %603 = vmatpush1.msra.mxu0 %v151
    %604 = vmatprep.subr.mxu0 %v160
    %605 = vmatpush1.msra.mxu0 %v159
    %606 = vmatprep.subr.mxu0 %v259
    %607 = vmatpush1.msra.mxu0 %v256
    %608 = vmatprep.subr.mxu0 0.0
    %609 = vmatpush1.msra.mxu0 0.0
    %610 = vmatprep.subr.mxu0 0.0
    %611 = vmatpush1.msra.mxu0 0.0
    %612 = vmatprep.subr.mxu0 0.0
    %613 = vmatpush1.msra.mxu0 0.0
    %614 = vmatprep.subr.mxu0 0.0
    %615 = vmatpush1.msra.mxu0 0.0
    %616 = vmatprep.subr.mxu0 0.0
    %617 = vmatpush1.msra.mxu0 0.0
    %618 = vmatprep.subr.mxu0 0.0
    %619 = vmatpush1.msra.mxu0 0.0
    %620 = vmatprep.subr.mxu0 0.0
    %621 = vmatpush1.msra.mxu0 0.0
    %622 = vmatprep.subr.mxu0 0.0
    %623 = vmatpush1.msra.mxu0 0.0
    %624 = vmatprep.subr.mxu0 0.0
    %625 = vmatpush1.msra.mxu0 0.0
    %626 = vmatprep.subr.mxu0 0.0
    %627 = vmatpush1.msra.mxu0 0.0
    %628 = vmatprep.subr.mxu0 0.0
    %629 = vmatpush1.msra.mxu0 0.0
    %630 = vmatprep.subr.mxu0 0.0
    %631 = vmatpush1.msra.mxu0 0.0
    %632 = vmatprep.subr.mxu0 0.0
    %633 = vmatpush1.msra.mxu0 0.0
    %634 = vmatprep.subr.mxu0 0.0
    %635 = vmatpush1.msra.mxu0 0.0
    %636 = vmatprep.subr.mxu0 0.0
    %637 = vmatpush1.msra.mxu0 0.0
    %638 = vmatprep.subr.mxu0 0.0
    %639 = vmatpush1.msra.mxu0 0.0
    %640 = vmatprep.subr.mxu0 0.0
    %641 = vmatpush1.msra.mxu0 0.0
    %642 = vmatprep.subr.mxu0 0.0
    %643 = vmatpush1.msra.mxu0 0.0
    %644 = vmatprep.subr.mxu0 0.0
    %645 = vmatpush1.msra.mxu0 0.0
    %646 = vmatprep.subr.mxu0 0.0
    %647 = vmatpush1.msra.mxu0 0.0
    %648 = vmatprep.subr.mxu0 0.0
    %649 = vmatpush1.msra.mxu0 0.0
    %650 = vmatprep.subr.mxu0 0.0
    %651 = vmatpush1.msra.mxu0 0.0
    %652 = vmatprep.subr.mxu0 0.0
    %653 = vmatpush1.msra.mxu0 0.0
    %654 = vmatprep.subr.mxu0 0.0
    %655 = vmatpush1.msra.mxu0 0.0
    %656 = vmatprep.subr.mxu0 0.0
    %657 = vmatpush1.msra.mxu0 0.0
    %658 = vmatprep.subr.mxu0 0.0
    %659 = vmatpush1.msra.mxu0 0.0
    %660 = vmatprep.subr.mxu0 0.0
    %661 = vmatpush1.msra.mxu0 0.0
    %662 = vmatprep.subr.mxu0 0.0
    %663 = vmatpush1.msra.mxu0 0.0
    %664 = vmatprep.mubr.f32.mxu0 0.0
    %665 = vmatmul.mubr.f32.gmra.mrb[0].mxu0 %v213
    %v666 = vpop.f32.mrb[0].mxu0
    %v667 = vadd.f32 %v198, %v666
    %v668 = vpop.f32.mrb[0].mxu0
    %v669 = vadd.f32 %v202, %v668
    %670 = vmatprep.mubr.f32.mxu0 0.0
    %671 = vmatmul.mubr.f32.gmra.mrb[0].mxu0 %v216
    %v672 = vpop.f32.mrb[0].mxu0
    %v673 = vadd.f32 %v198, %v672
    %v674 = vpop.f32.mrb[0].mxu0
    %v675 = vadd.f32 %v202, %v674
    %676 = vmatprep.mubr.f32.mxu0 0.0
    %677 = vmatmul.mubr.f32.gmra.mrb[0].mxu0 %v219
    %v678 = vpop.f32.mrb[0].mxu0
    %v679 = vadd.f32 %v198, %v678
    %v680 = vpop.f32.mrb[0].mxu0
    %v681 = vadd.f32 %v202, %v680
    %682 = vmatprep.mubr.f32.mxu0 0.0
    %683 = vmatmul.mubr.f32.gmra.mrb[0].mxu0 %v222
    %v684 = vpop.f32.mrb[0].mxu0
    %v685 = vadd.f32 %v198, %v684
    %v686 = vpop.f32.mrb[0].mxu0
    %v687 = vadd.f32 %v202, %v686
    %688 = vmatprep.mubr.f32.mxu0 0.0
    %689 = vmatmul.mubr.f32.gmra.mrb[0].mxu0 %v225
    %v690 = vpop.f32.mrb[0].mxu0
    %v691 = vadd.f32 %v198, %v690
    %v692 = vpop.f32.mrb[0].mxu0
    %v693 = vadd.f32 %v202, %v692
    %694 = vmatprep.mubr.f32.mxu0 0.0
    %695 = vmatmul.mubr.f32.gmra.mrb[0].mxu0 %v228
    %v696 = vpop.f32.mrb[0].mxu0
    %v697 = vadd.f32 %v198, %v696
    %v698 = vpop.f32.mrb[0].mxu0
    %v699 = vadd.f32 %v202, %v698
    %700 = vmatprep.mubr.f32.mxu0 0.0
    %701 = vmatmul.mubr.f32.gmra.mrb[0].mxu0 %v231
    %v702 = vpop.f32.mrb[0].mxu0
    %v703 = vadd.f32 %v198, %v702
    %v704 = vpop.f32.mrb[0].mxu0
    %v705 = vadd.f32 %v202, %v704
    %706 = vmatprep.mubr.f32.mxu0 0.0
    %707 = vmatmul.mubr.f32.gmra.mrb[0].mxu0 %v234
    %v708 = vpop.f32.mrb[0].mxu0
    %v709 = vadd.f32 %v198, %v708
    %v710 = vpop.f32.mrb[0].mxu0
    %v711 = vadd.f32 %v202, %v710
    %712 = vdwg.mxu0
    %713 = vst [vmem:[#allocation2] sm:$0xff] %v328
    %714 = vst [vmem:[#allocation2 + $0x8] sm:$0xff] %v330
    %715 = vst [vmem:[#allocation2 + $0x10] sm:$0xff] %v441
    %716 = vst [vmem:[#allocation2 + $0x18] sm:$0xff] %v443
    %717 = vst [vmem:[#allocation2 + $0x20] sm:$0xff] %v554
    %718 = vst [vmem:[#allocation2 + $0x28] sm:$0xff] %v556
    %719 = vst [vmem:[#allocation2 + $0x30] sm:$0xff] %v667
    %720 = vst [vmem:[#allocation2 + $0x38] sm:$0xff] %v669
    %721 = vst [vmem:[#allocation2 + $0x40] sm:$0xff] %v334
    %722 = vst [vmem:[#allocation2 + $0x48] sm:$0xff] %v336
    %723 = vst [vmem:[#allocation2 + $0x50] sm:$0xff] %v447
    %724 = vst [vmem:[#allocation2 + $0x58] sm:$0xff] %v449
    %725 = vst [vmem:[#allocation2 + $0x60] sm:$0xff] %v560
    %726 = vst [vmem:[#allocation2 + $0x68] sm:$0xff] %v562
    %727 = vst [vmem:[#allocation2 + $0x70] sm:$0xff] %v673
    %728 = vst [vmem:[#allocation2 + $0x78] sm:$0xff] %v675
    %729 = vst [vmem:[#allocation2 + $0x80] sm:$0xff] %v340
    %730 = vst [vmem:[#allocation2 + $0x88] sm:$0xff] %v342
    %731 = vst [vmem:[#allocation2 + $0x90] sm:$0xff] %v453
    %732 = vst [vmem:[#allocation2 + $0x98] sm:$0xff] %v455
    %733 = vst [vmem:[#allocation2 + $0xa0] sm:$0xff] %v566
    %734 = vst [vmem:[#allocation2 + $0xa8] sm:$0xff] %v568
    %735 = vst [vmem:[#allocation2 + $0xb0] sm:$0xff] %v679
    %736 = vst [vmem:[#allocation2 + $0xb8] sm:$0xff] %v681
    %737 = vst [vmem:[#allocation2 + $0xc0] sm:$0xff] %v346
    %738 = vst [vmem:[#allocation2 + $0xc8] sm:$0xff] %v348
    %739 = vst [vmem:[#allocation2 + $0xd0] sm:$0xff] %v459
    %740 = vst [vmem:[#allocation2 + $0xd8] sm:$0xff] %v461
    %741 = vst [vmem:[#allocation2 + $0xe0] sm:$0xff] %v572
    %742 = vst [vmem:[#allocation2 + $0xe8] sm:$0xff] %v574
    %743 = vst [vmem:[#allocation2 + $0xf0] sm:$0xff] %v685
    %744 = vst [vmem:[#allocation2 + $0xf8] sm:$0xff] %v687
    %745 = vst [vmem:[#allocation2 + $0x100] sm:$0xff] %v352
    %746 = vst [vmem:[#allocation2 + $0x108] sm:$0xff] %v354
    %747 = vst [vmem:[#allocation2 + $0x110] sm:$0xff] %v465
    %748 = vst [vmem:[#allocation2 + $0x118] sm:$0xff] %v467
    %749 = vst [vmem:[#allocation2 + $0x120] sm:$0xff] %v578
    %750 = vst [vmem:[#allocation2 + $0x128] sm:$0xff] %v580
    %751 = vst [vmem:[#allocation2 + $0x130] sm:$0xff] %v691
    %752 = vst [vmem:[#allocation2 + $0x138] sm:$0xff] %v693
    %753 = vst [vmem:[#allocation2 + $0x140] sm:$0xff] %v358
    %754 = vst [vmem:[#allocation2 + $0x148] sm:$0xff] %v360
    %755 = vst [vmem:[#allocation2 + $0x150] sm:$0xff] %v471
    %756 = vst [vmem:[#allocation2 + $0x158] sm:$0xff] %v473
    %757 = vst [vmem:[#allocation2 + $0x160] sm:$0xff] %v584
    %758 = vst [vmem:[#allocation2 + $0x168] sm:$0xff] %v586
    %759 = vst [vmem:[#allocation2 + $0x170] sm:$0xff] %v697
    %760 = vst [vmem:[#allocation2 + $0x178] sm:$0xff] %v699
    %761 = vst [vmem:[#allocation2 + $0x180] sm:$0xff] %v364
    %762 = vst [vmem:[#allocation2 + $0x188] sm:$0xff] %v366
    %763 = vst [vmem:[#allocation2 + $0x190] sm:$0xff] %v477
    %764 = vst [vmem:[#allocation2 + $0x198] sm:$0xff] %v479
    %765 = vst [vmem:[#allocation2 + $0x1a0] sm:$0xff] %v590
    %766 = vst [vmem:[#allocation2 + $0x1a8] sm:$0xff] %v592
    %767 = vst [vmem:[#allocation2 + $0x1b0] sm:$0xff] %v703
    %768 = vst [vmem:[#allocation2 + $0x1b8] sm:$0xff] %v705
    %769 = vst [vmem:[#allocation2 + $0x1c0] sm:$0xff] %v370
    %770 = vst [vmem:[#allocation2 + $0x1c8] sm:$0xff] %v372
    %771 = vst [vmem:[#allocation2 + $0x1d0] sm:$0xff] %v483
    %772 = vst [vmem:[#allocation2 + $0x1d8] sm:$0xff] %v485
    %773 = vst [vmem:[#allocation2 + $0x1e0] sm:$0xff] %v596
    %774 = vst [vmem:[#allocation2 + $0x1e8] sm:$0xff] %v598
    %775 = vst [vmem:[#allocation2 + $0x1f0] sm:$0xff] %v709
    %776 = vst [vmem:[#allocation2 + $0x1f8] sm:$0xff] %v711
    %v777 = vld [vmem:[#allocation2] sm:$0xff]
    %v778 = vld [vmem:[#allocation2 + $0x8] sm:$0xff]
    %v779 = vld [vmem:[#allocation2 + $0x10] sm:$0xff]
    %v780 = vld [vmem:[#allocation2 + $0x18] sm:$0xff]
    %781 = vmatprep.subr.mxu0 %v66
    %782 = vmatpush1.msra.mxu0 %v65
    %783 = vmatprep.subr.mxu0 %v70
    %784 = vmatpush1.msra.mxu0 %v69
    %785 = vmatprep.subr.mxu0 %v74
    %786 = vmatpush1.msra.mxu0 %v73
    %787 = vmatprep.subr.mxu0 %v78
    %788 = vmatpush1.msra.mxu0 %v77
    %789 = vmatprep.subr.mxu0 %v82
    %790 = vmatpush1.msra.mxu0 %v81
    %791 = vmatprep.subr.mxu0 %v86
    %792 = vmatpush1.msra.mxu0 %v85
    %793 = vmatprep.subr.mxu0 %v90
    %794 = vmatpush1.msra.mxu0 %v89
    %795 = vmatprep.subr.mxu0 %v94
    %796 = vmatpush1.msra.mxu0 %v93
    %797 = vmatprep.subr.mxu0 %v98
    %798 = vmatpush1.msra.mxu0 %v97
    %799 = vmatprep.subr.mxu0 %v102
    %800 = vmatpush1.msra.mxu0 %v101
    %801 = vmatprep.subr.mxu0 %v106
    %802 = vmatpush1.msra.mxu0 %v105
    %803 = vmatprep.subr.mxu0 %v110
    %804 = vmatpush1.msra.mxu0 %v109
    %805 = vmatprep.subr.mxu0 %v114
    %806 = vmatpush1.msra.mxu0 %v113
    %807 = vmatprep.subr.mxu0 %v118
    %808 = vmatpush1.msra.mxu0 %v117
    %809 = vmatprep.subr.mxu0 %v122
    %810 = vmatpush1.msra.mxu0 %v121
    %811 = vmatprep.subr.mxu0 %v126
    %812 = vmatpush1.msra.mxu0 %v125
    %813 = vmatprep.subr.mxu0 0.0
    %814 = vmatpush1.msra.mxu0 0.0
    %815 = vmatprep.subr.mxu0 0.0
    %816 = vmatpush1.msra.mxu0 0.0
    %817 = vmatprep.subr.mxu0 0.0
    %818 = vmatpush1.msra.mxu0 0.0
    %819 = vmatprep.subr.mxu0 0.0
    %820 = vmatpush1.msra.mxu0 0.0
    %821 = vmatprep.subr.mxu0 0.0
    %822 = vmatpush1.msra.mxu0 0.0
    %823 = vmatprep.subr.mxu0 0.0
    %824 = vmatpush1.msra.mxu0 0.0
    %825 = vmatprep.subr.mxu0 0.0
    %826 = vmatpush1.msra.mxu0 0.0
    %827 = vmatprep.subr.mxu0 0.0
    %828 = vmatpush1.msra.mxu0 0.0
    %829 = vmatprep.subr.mxu0 0.0
    %830 = vmatpush1.msra.mxu0 0.0
    %831 = vmatprep.subr.mxu0 0.0
    %832 = vmatpush1.msra.mxu0 0.0
    %833 = vmatprep.subr.mxu0 0.0
    %834 = vmatpush1.msra.mxu0 0.0
    %835 = vmatprep.subr.mxu0 0.0
    %836 = vmatpush1.msra.mxu0 0.0
    %837 = vmatprep.subr.mxu0 0.0
    %838 = vmatpush1.msra.mxu0 0.0
    %839 = vmatprep.subr.mxu0 0.0
    %840 = vmatpush1.msra.mxu0 0.0
    %841 = vmatprep.subr.mxu0 0.0
    %842 = vmatpush1.msra.mxu0 0.0
    %843 = vmatprep.subr.mxu0 0.0
    %844 = vmatpush1.msra.mxu0 0.0
    %845 = vmatprep.mubr.f32.mxu0 0.0
    %846 = vmatmul.mubr.f32.gmra.mrb[0].mxu0 0.0
    %v847 = vpop.f32.mrb[0].mxu0
    %v848 = vadd.f32 0.0, %v847
    %v849 = vpop.f32.mrb[0].mxu0
    %v850 = vadd.f32 0.0, %v849
    %851 = vdwg.mxu0
    %852 = vmatprep.subr.mxu0 %v68
    %853 = vmatpush1.msra.mxu0 %v67
    %854 = vmatprep.subr.mxu0 %v72
    %855 = vmatpush1.msra.mxu0 %v71
    %856 = vmatprep.subr.mxu0 %v76
    %857 = vmatpush1.msra.mxu0 %v75
    %858 = vmatprep.subr.mxu0 %v80
    %859 = vmatpush1.msra.mxu0 %v79
    %860 = vmatprep.subr.mxu0 %v84
    %861 = vmatpush1.msra.mxu0 %v83
    %862 = vmatprep.subr.mxu0 %v88
    %863 = vmatpush1.msra.mxu0 %v87
    %864 = vmatprep.subr.mxu0 %v92
    %865 = vmatpush1.msra.mxu0 %v91
    %866 = vmatprep.subr.mxu0 %v96
    %867 = vmatpush1.msra.mxu0 %v95
    %868 = vmatprep.subr.mxu0 %v100
    %869 = vmatpush1.msra.mxu0 %v99
    %870 = vmatprep.subr.mxu0 %v104
    %871 = vmatpush1.msra.mxu0 %v103
    %872 = vmatprep.subr.mxu0 %v108
    %873 = vmatpush1.msra.mxu0 %v107
    %874 = vmatprep.subr.mxu0 %v112
    %875 = vmatpush1.msra.mxu0 %v111
    %876 = vmatprep.subr.mxu0 %v116
    %877 = vmatpush1.msra.mxu0 %v115
    %878 = vmatprep.subr.mxu0 %v120
    %879 = vmatpush1.msra.mxu0 %v119
    %880 = vmatprep.subr.mxu0 %v124
    %881 = vmatpush1.msra.mxu0 %v123
    %882 = vmatprep.subr.mxu0 %v128
    %883 = vmatpush1.msra.mxu0 %v127
    %884 = vmatprep.subr.mxu0 0.0
    %885 = vmatpush1.msra.mxu0 0.0
    %886 = vmatprep.subr.mxu0 0.0
    %887 = vmatpush1.msra.mxu0 0.0
    %888 = vmatprep.subr.mxu0 0.0
    %889 = vmatpush1.msra.mxu0 0.0
    %890 = vmatprep.subr.mxu0 0.0
    %891 = vmatpush1.msra.mxu0 0.0
    %892 = vmatprep.subr.mxu0 0.0
    %893 = vmatpush1.msra.mxu0 0.0
    %894 = vmatprep.subr.mxu0 0.0
    %895 = vmatpush1.msra.mxu0 0.0
    %896 = vmatprep.subr.mxu0 0.0
    %897 = vmatpush1.msra.mxu0 0.0
    %898 = vmatprep.subr.mxu0 0.0
    %899 = vmatpush1.msra.mxu0 0.0
    %900 = vmatprep.subr.mxu0 0.0
    %901 = vmatpush1.msra.mxu0 0.0
    %902 = vmatprep.subr.mxu0 0.0
    %903 = vmatpush1.msra.mxu0 0.0
    %904 = vmatprep.subr.mxu0 0.0
    %905 = vmatpush1.msra.mxu0 0.0
    %906 = vmatprep.subr.mxu0 0.0
    %907 = vmatpush1.msra.mxu0 0.0
    %908 = vmatprep.subr.mxu0 0.0
    %909 = vmatpush1.msra.mxu0 0.0
    %910 = vmatprep.subr.mxu0 0.0
    %911 = vmatpush1.msra.mxu0 0.0
    %912 = vmatprep.subr.mxu0 0.0
    %913 = vmatpush1.msra.mxu0 0.0
    %914 = vmatprep.subr.mxu0 0.0
    %915 = vmatpush1.msra.mxu0 0.0
    %916 = vmatprep.mubr.f32.mxu0 0.0
    %917 = vmatmul.mubr.f32.gmra.mrb[0].mxu0 0.0
    %v918 = vpop.f32.mrb[0].mxu0
    %v919 = vadd.f32 0.0, %v918
    %v920 = vpop.f32.mrb[0].mxu0
    %v921 = vadd.f32 0.0, %v920
    %922 = vdwg.mxu0
    %v923 = vadd.f32 %v777, %v848
    %v924 = vadd.f32 %v778, %v850
    %v925 = vadd.f32 %v779, %v919
    %v926 = vadd.f32 %v780, %v921
    %v927 = vxor.u32 %v923, 2147483648
    %v928 = vmul.f32 %v927, 1.442695
    %v929 = vpow.pop %v928
    %v930 = vadd.f32 %v929, 1.0
    %v931 = vrcp.pop %v930
    %v932 = vmul.f32 1.0, %v931
    %v933 = vxor.u32 %v924, 2147483648
    %v934 = vmul.f32 %v933, 1.442695
    %v935 = vpow.pop %v934
    %v936 = vadd.f32 %v935, 1.0
    %v937 = vrcp.pop %v936
    %v938 = vmul.f32 1.0, %v937
    %v939 = vtanh.pop %v925
    %v940 = vxor.u32 %v926, 2147483648
    %v941 = vmul.f32 %v940, 1.442695
    %v942 = vpow.pop %v941
    %v943 = vadd.f32 %v942, 1.0
    %v944 = vrcp.pop %v943
    %v945 = vmul.f32 1.0, %v944
    %v946 = vmul.f32 %v938, 0.0
    %v947 = vmul.f32 %v932, %v939
    %v948 = vadd.f32 %v946, %v947
    %v949 = vtanh.pop %v948
    %v950 = vmul.f32 %v945, %v949
    %v951 = vld [vmem:[#allocation2 + $0x40] sm:$0xff]
    %v952 = vld [vmem:[#allocation2 + $0x48] sm:$0xff]
    %v953 = vld [vmem:[#allocation2 + $0x50] sm:$0xff]
    %v954 = vld [vmem:[#allocation2 + $0x58] sm:$0xff]
    %955 = vmatprep.subr.mxu0 %v66
    %956 = vmatpush1.msra.mxu0 %v65
    %957 = vmatprep.subr.mxu0 %v70
    %958 = vmatpush1.msra.mxu0 %v69
    %959 = vmatprep.subr.mxu0 %v74
    %960 = vmatpush1.msra.mxu0 %v73
    %961 = vmatprep.subr.mxu0 %v78
    %962 = vmatpush1.msra.mxu0 %v77
    %963 = vmatprep.subr.mxu0 %v82
    %964 = vmatpush1.msra.mxu0 %v81
    %965 = vmatprep.subr.mxu0 %v86
    %966 = vmatpush1.msra.mxu0 %v85
    %967 = vmatprep.subr.mxu0 %v90
    %968 = vmatpush1.msra.mxu0 %v89
    %969 = vmatprep.subr.mxu0 %v94
    %970 = vmatpush1.msra.mxu0 %v93
    %971 = vmatprep.subr.mxu0 %v98
    %972 = vmatpush1.msra.mxu0 %v97
    %973 = vmatprep.subr.mxu0 %v102
    %974 = vmatpush1.msra.mxu0 %v101
    %975 = vmatprep.subr.mxu0 %v106
    %976 = vmatpush1.msra.mxu0 %v105
    %977 = vmatprep.subr.mxu0 %v110
    %978 = vmatpush1.msra.mxu0 %v109
    %979 = vmatprep.subr.mxu0 %v114
    %980 = vmatpush1.msra.mxu0 %v113
    %981 = vmatprep.subr.mxu0 %v118
    %982 = vmatpush1.msra.mxu0 %v117
    %983 = vmatprep.subr.mxu0 %v122
    %984 = vmatpush1.msra.mxu0 %v121
    %985 = vmatprep.subr.mxu0 %v126
    %986 = vmatpush1.msra.mxu0 %v125
    %987 = vmatprep.subr.mxu0 0.0
    %988 = vmatpush1.msra.mxu0 0.0
    %989 = vmatprep.subr.mxu0 0.0
    %990 = vmatpush1.msra.mxu0 0.0
    %991 = vmatprep.subr.mxu0 0.0
    %992 = vmatpush1.msra.mxu0 0.0
    %993 = vmatprep.subr.mxu0 0.0
    %994 = vmatpush1.msra.mxu0 0.0
    %995 = vmatprep.subr.mxu0 0.0
    %996 = vmatpush1.msra.mxu0 0.0
    %997 = vmatprep.subr.mxu0 0.0
    %998 = vmatpush1.msra.mxu0 0.0
    %999 = vmatprep.subr.mxu0 0.0
    %1000 = vmatpush1.msra.mxu0 0.0
    %1001 = vmatprep.subr.mxu0 0.0
    %1002 = vmatpush1.msra.mxu0 0.0
    %1003 = vmatprep.subr.mxu0 0.0
    %1004 = vmatpush1.msra.mxu0 0.0
    %1005 = vmatprep.subr.mxu0 0.0
    %1006 = vmatpush1.msra.mxu0 0.0
    %1007 = vmatprep.subr.mxu0 0.0
    %1008 = vmatpush1.msra.mxu0 0.0
    %1009 = vmatprep.subr.mxu0 0.0
    %1010 = vmatpush1.msra.mxu0 0.0
    %1011 = vmatprep.subr.mxu0 0.0
    %1012 = vmatpush1.msra.mxu0 0.0
    %1013 = vmatprep.subr.mxu0 0.0
    %1014 = vmatpush1.msra.mxu0 0.0
    %1015 = vmatprep.subr.mxu0 0.0
    %1016 = vmatpush1.msra.mxu0 0.0
    %1017 = vmatprep.subr.mxu0 0.0
    %1018 = vmatpush1.msra.mxu0 0.0
    %1019 = vmatprep.mubr.f32.mxu0 0.0
    %1020 = vmatmul.mubr.f32.gmra.mrb[0].mxu0 %v950
    %v1021 = vpop.f32.mrb[0].mxu0
    %v1022 = vadd.f32 0.0, %v1021
    %v1023 = vpop.f32.mrb[0].mxu0
    %v1024 = vadd.f32 0.0, %v1023
    %1025 = vdwg.mxu0
    %1026 = vmatprep.subr.mxu0 %v68
    %1027 = vmatpush1.msra.mxu0 %v67
    %1028 = vmatprep.subr.mxu0 %v72
    %1029 = vmatpush1.msra.mxu0 %v71
    %1030 = vmatprep.subr.mxu0 %v76
    %1031 = vmatpush1.msra.mxu0 %v75
    %1032 = vmatprep.subr.mxu0 %v80
    %1033 = vmatpush1.msra.mxu0 %v79
    %1034 = vmatprep.subr.mxu0 %v84
    %1035 = vmatpush1.msra.mxu0 %v83
    %1036 = vmatprep.subr.mxu0 %v88
    %1037 = vmatpush1.msra.mxu0 %v87
    %1038 = vmatprep.subr.mxu0 %v92
    %1039 = vmatpush1.msra.mxu0 %v91
    %1040 = vmatprep.subr.mxu0 %v96
    %1041 = vmatpush1.msra.mxu0 %v95
    %1042 = vmatprep.subr.mxu0 %v100
    %1043 = vmatpush1.msra.mxu0 %v99
    %1044 = vmatprep.subr.mxu0 %v104
    %1045 = vmatpush1.msra.mxu0 %v103
    %1046 = vmatprep.subr.mxu0 %v108
    %1047 = vmatpush1.msra.mxu0 %v107
    %1048 = vmatprep.subr.mxu0 %v112
    %1049 = vmatpush1.msra.mxu0 %v111
    %1050 = vmatprep.subr.mxu0 %v116
    %1051 = vmatpush1.msra.mxu0 %v115
    %1052 = vmatprep.subr.mxu0 %v120
    %1053 = vmatpush1.msra.mxu0 %v119
    %1054 = vmatprep.subr.mxu0 %v124
    %1055 = vmatpush1.msra.mxu0 %v123
    %1056 = vmatprep.subr.mxu0 %v128
    %1057 = vmatpush1.msra.mxu0 %v127
    %1058 = vmatprep.subr.mxu0 0.0
    %1059 = vmatpush1.msra.mxu0 0.0
    %1060 = vmatprep.subr.mxu0 0.0
    %1061 = vmatpush1.msra.mxu0 0.0
    %1062 = vmatprep.subr.mxu0 0.0
    %1063 = vmatpush1.msra.mxu0 0.0
    %1064 = vmatprep.subr.mxu0 0.0
    %1065 = vmatpush1.msra.mxu0 0.0
    %1066 = vmatprep.subr.mxu0 0.0
    %1067 = vmatpush1.msra.mxu0 0.0
    %1068 = vmatprep.subr.mxu0 0.0
    %1069 = vmatpush1.msra.mxu0 0.0
    %1070 = vmatprep.subr.mxu0 0.0
    %1071 = vmatpush1.msra.mxu0 0.0
    %1072 = vmatprep.subr.mxu0 0.0
    %1073 = vmatpush1.msra.mxu0 0.0
    %1074 = vmatprep.subr.mxu0 0.0
    %1075 = vmatpush1.msra.mxu0 0.0
    %1076 = vmatprep.subr.mxu0 0.0
    %1077 = vmatpush1.msra.mxu0 0.0
    %1078 = vmatprep.subr.mxu0 0.0
    %1079 = vmatpush1.msra.mxu0 0.0
    %1080 = vmatprep.subr.mxu0 0.0
    %1081 = vmatpush1.msra.mxu0 0.0
    %1082 = vmatprep.subr.mxu0 0.0
    %1083 = vmatpush1.msra.mxu0 0.0
    %1084 = vmatprep.subr.mxu0 0.0
    %1085 = vmatpush1.msra.mxu0 0.0
    %1086 = vmatprep.subr.mxu0 0.0
    %1087 = vmatpush1.msra.mxu0 0.0
    %1088 = vmatprep.subr.mxu0 0.0
    %1089 = vmatpush1.msra.mxu0 0.0
    %1090 = vmatprep.mubr.f32.mxu0 0.0
    %1091 = vmatmul.mubr.f32.gmra.mrb[0].mxu0 %v950
    %v1092 = vpop.f32.mrb[0].mxu0
    %v1093 = vadd.f32 0.0, %v1092
    %v1094 = vpop.f32.mrb[0].mxu0
    %v1095 = vadd.f32 0.0, %v1094
    %1096 = vdwg.mxu0
    %v1097 = vadd.f32 %v951, %v1022
    %v1098 = vadd.f32 %v952, %v1024
    %v1099 = vadd.f32 %v953, %v1093
    %v1100 = vadd.f32 %v954, %v1095
    %v1101 = vxor.u32 %v1097, 2147483648
    %v1102 = vmul.f32 %v1101, 1.442695
    %v1103 = vpow.pop %v1102
    %v1104 = vadd.f32 %v1103, 1.0
    %v1105 = vrcp.pop %v1104
    %v1106 = vmul.f32 1.0, %v1105
    %v1107 = vxor.u32 %v1098, 2147483648
    %v1108 = vmul.f32 %v1107, 1.442695
    %v1109 = vpow.pop %v1108
    %v1110 = vadd.f32 %v1109, 1.0
    %v1111 = vrcp.pop %v1110
    %v1112 = vmul.f32 1.0, %v1111
    %v1113 = vtanh.pop %v1099
    %v1114 = vxor.u32 %v1100, 2147483648
    %v1115 = vmul.f32 %v1114, 1.442695
    %v1116 = vpow.pop %v1115
    %v1117 = vadd.f32 %v1116, 1.0
    %v1118 = vrcp.pop %v1117
    %v1119 = vmul.f32 1.0, %v1118
    %v1120 = vmul.f32 %v1112, %v948
    %v1121 = vmul.f32 %v1106, %v1113
    %v1122 = vadd.f32 %v1120, %v1121
    %v1123 = vtanh.pop %v1122
    %v1124 = vmul.f32 %v1119, %v1123
    %v1125 = vld [vmem:[#allocation2 + $0x80] sm:$0xff]
    %v1126 = vld [vmem:[#allocation2 + $0x88] sm:$0xff]
    %v1127 = vld [vmem:[#allocation2 + $0x90] sm:$0xff]
    %v1128 = vld [vmem:[#allocation2 + $0x98] sm:$0xff]
    %1129 = vmatprep.subr.mxu0 %v66
    %1130 = vmatpush1.msra.mxu0 %v65
    %1131 = vmatprep.subr.mxu0 %v70
    %1132 = vmatpush1.msra.mxu0 %v69
    %1133 = vmatprep.subr.mxu0 %v74
    %1134 = vmatpush1.msra.mxu0 %v73
    %1135 = vmatprep.subr.mxu0 %v78
    %1136 = vmatpush1.msra.mxu0 %v77
    %1137 = vmatprep.subr.mxu0 %v82
    %1138 = vmatpush1.msra.mxu0 %v81
    %1139 = vmatprep.subr.mxu0 %v86
    %1140 = vmatpush1.msra.mxu0 %v85
    %1141 = vmatprep.subr.mxu0 %v90
    %1142 = vmatpush1.msra.mxu0 %v89
    %1143 = vmatprep.subr.mxu0 %v94
    %1144 = vmatpush1.msra.mxu0 %v93
    %1145 = vmatprep.subr.mxu0 %v98
    %1146 = vmatpush1.msra.mxu0 %v97
    %1147 = vmatprep.subr.mxu0 %v102
    %1148 = vmatpush1.msra.mxu0 %v101
    %1149 = vmatprep.subr.mxu0 %v106
    %1150 = vmatpush1.msra.mxu0 %v105
    %1151 = vmatprep.subr.mxu0 %v110
    %1152 = vmatpush1.msra.mxu0 %v109
    %1153 = vmatprep.subr.mxu0 %v114
    %1154 = vmatpush1.msra.mxu0 %v113
    %1155 = vmatprep.subr.mxu0 %v118
    %1156 = vmatpush1.msra.mxu0 %v117
    %1157 = vmatprep.subr.mxu0 %v122
    %1158 = vmatpush1.msra.mxu0 %v121
    %1159 = vmatprep.subr.mxu0 %v126
    %1160 = vmatpush1.msra.mxu0 %v125
    %1161 = vmatprep.subr.mxu0 0.0
    %1162 = vmatpush1.msra.mxu0 0.0
    %1163 = vmatprep.subr.mxu0 0.0
    %1164 = vmatpush1.msra.mxu0 0.0
    %1165 = vmatprep.subr.mxu0 0.0
    %1166 = vmatpush1.msra.mxu0 0.0
    %1167 = vmatprep.subr.mxu0 0.0
    %1168 = vmatpush1.msra.mxu0 0.0
    %1169 = vmatprep.subr.mxu0 0.0
    %1170 = vmatpush1.msra.mxu0 0.0
    %1171 = vmatprep.subr.mxu0 0.0
    %1172 = vmatpush1.msra.mxu0 0.0
    %1173 = vmatprep.subr.mxu0 0.0
    %1174 = vmatpush1.msra.mxu0 0.0
    %1175 = vmatprep.subr.mxu0 0.0
    %1176 = vmatpush1.msra.mxu0 0.0
    %1177 = vmatprep.subr.mxu0 0.0
    %1178 = vmatpush1.msra.mxu0 0.0
    %1179 = vmatprep.subr.mxu0 0.0
    %1180 = vmatpush1.msra.mxu0 0.0
    %1181 = vmatprep.subr.mxu0 0.0
    %1182 = vmatpush1.msra.mxu0 0.0
    %1183 = vmatprep.subr.mxu0 0.0
    %1184 = vmatpush1.msra.mxu0 0.0
    %1185 = vmatprep.subr.mxu0 0.0
    %1186 = vmatpush1.msra.mxu0 0.0
    %1187 = vmatprep.subr.mxu0 0.0
    %1188 = vmatpush1.msra.mxu0 0.0
    %1189 = vmatprep.subr.mxu0 0.0
    %1190 = vmatpush1.msra.mxu0 0.0
    %1191 = vmatprep.subr.mxu0 0.0
    %1192 = vmatpush1.msra.mxu0 0.0
    %1193 = vmatprep.mubr.f32.mxu0 0.0
    %1194 = vmatmul.mubr.f32.gmra.mrb[0].mxu0 %v1124
    %v1195 = vpop.f32.mrb[0].mxu0
    %v1196 = vadd.f32 0.0, %v1195
    %v1197 = vpop.f32.mrb[0].mxu0
    %v1198 = vadd.f32 0.0, %v1197
    %1199 = vdwg.mxu0
    %1200 = vmatprep.subr.mxu0 %v68
    %1201 = vmatpush1.msra.mxu0 %v67
    %1202 = vmatprep.subr.mxu0 %v72
    %1203 = vmatpush1.msra.mxu0 %v71
    %1204 = vmatprep.subr.mxu0 %v76
    %1205 = vmatpush1.msra.mxu0 %v75
    %1206 = vmatprep.subr.mxu0 %v80
    %1207 = vmatpush1.msra.mxu0 %v79
    %1208 = vmatprep.subr.mxu0 %v84
    %1209 = vmatpush1.msra.mxu0 %v83
    %1210 = vmatprep.subr.mxu0 %v88
    %1211 = vmatpush1.msra.mxu0 %v87
    %1212 = vmatprep.subr.mxu0 %v92
    %1213 = vmatpush1.msra.mxu0 %v91
    %1214 = vmatprep.subr.mxu0 %v96
    %1215 = vmatpush1.msra.mxu0 %v95
    %1216 = vmatprep.subr.mxu0 %v100
    %1217 = vmatpush1.msra.mxu0 %v99
    %1218 = vmatprep.subr.mxu0 %v104
    %1219 = vmatpush1.msra.mxu0 %v103
    %1220 = vmatprep.subr.mxu0 %v108
    %1221 = vmatpush1.msra.mxu0 %v107
    %1222 = vmatprep.subr.mxu0 %v112
    %1223 = vmatpush1.msra.mxu0 %v111
    %1224 = vmatprep.subr.mxu0 %v116
    %1225 = vmatpush1.msra.mxu0 %v115
    %1226 = vmatprep.subr.mxu0 %v120
    %1227 = vmatpush1.msra.mxu0 %v119
    %1228 = vmatprep.subr.mxu0 %v124
    %1229 = vmatpush1.msra.mxu0 %v123
    %1230 = vmatprep.subr.mxu0 %v128
    %1231 = vmatpush1.msra.mxu0 %v127
    %1232 = vmatprep.subr.mxu0 0.0
    %1233 = vmatpush1.msra.mxu0 0.0
    %1234 = vmatprep.subr.mxu0 0.0
    %1235 = vmatpush1.msra.mxu0 0.0
    %1236 = vmatprep.subr.mxu0 0.0
    %1237 = vmatpush1.msra.mxu0 0.0
    %1238 = vmatprep.subr.mxu0 0.0
    %1239 = vmatpush1.msra.mxu0 0.0
    %1240 = vmatprep.subr.mxu0 0.0
    %1241 = vmatpush1.msra.mxu0 0.0
    %1242 = vmatprep.subr.mxu0 0.0
    %1243 = vmatpush1.msra.mxu0 0.0
    %1244 = vmatprep.subr.mxu0 0.0
    %1245 = vmatpush1.msra.mxu0 0.0
    %1246 = vmatprep.subr.mxu0 0.0
    %1247 = vmatpush1.msra.mxu0 0.0
    %1248 = vmatprep.subr.mxu0 0.0
    %1249 = vmatpush1.msra.mxu0 0.0
    %1250 = vmatprep.subr.mxu0 0.0
    %1251 = vmatpush1.msra.mxu0 0.0
    %1252 = vmatprep.subr.mxu0 0.0
    %1253 = vmatpush1.msra.mxu0 0.0
    %1254 = vmatprep.subr.mxu0 0.0
    %1255 = vmatpush1.msra.mxu0 0.0
    %1256 = vmatprep.subr.mxu0 0.0
    %1257 = vmatpush1.msra.mxu0 0.0
    %1258 = vmatprep.subr.mxu0 0.0
    %1259 = vmatpush1.msra.mxu0 0.0
    %1260 = vmatprep.subr.mxu0 0.0
    %1261 = vmatpush1.msra.mxu0 0.0
    %1262 = vmatprep.subr.mxu0 0.0
    %1263 = vmatpush1.msra.mxu0 0.0
    %1264 = vmatprep.mubr.f32.mxu0 0.0
    %1265 = vmatmul.mubr.f32.gmra.mrb[0].mxu0 %v1124
    %v1266 = vpop.f32.mrb[0].mxu0
    %v1267 = vadd.f32 0.0, %v1266
    %v1268 = vpop.f32.mrb[0].mxu0
    %v1269 = vadd.f32 0.0, %v1268
    %1270 = vdwg.mxu0
    %v1271 = vadd.f32 %v1125, %v1196
    %v1272 = vadd.f32 %v1126, %v1198
    %v1273 = vadd.f32 %v1127, %v1267
    %v1274 = vadd.f32 %v1128, %v1269
    %v1275 = vxor.u32 %v1271, 2147483648
    %v1276 = vmul.f32 %v1275, 1.442695
    %v1277 = vpow.pop %v1276
    %v1278 = vadd.f32 %v1277, 1.0
    %v1279 = vrcp.pop %v1278
    %v1280 = vmul.f32 1.0, %v1279
    %v1281 = vxor.u32 %v1272, 2147483648
    %v1282 = vmul.f32 %v1281, 1.442695
    %v1283 = vpow.pop %v1282
    %v1284 = vadd.f32 %v1283, 1.0
    %v1285 = vrcp.pop %v1284
    %v1286 = vmul.f32 1.0, %v1285
    %v1287 = vtanh.pop %v1273
    %v1288 = vxor.u32 %v1274, 2147483648
    %v1289 = vmul.f32 %v1288, 1.442695
    %v1290 = vpow.pop %v1289
    %v1291 = vadd.f32 %v1290, 1.0
    %v1292 = vrcp.pop %v1291
    %v1293 = vmul.f32 1.0, %v1292
    %v1294 = vmul.f32 %v1286, %v1122
    %v1295 = vmul.f32 %v1280, %v1287
    %v1296 = vadd.f32 %v1294, %v1295
    %v1297 = vtanh.pop %v1296
    %v1298 = vmul.f32 %v1293, %v1297
    %v1299 = vld [vmem:[#allocation2 + $0xc0] sm:$0xff]
    %v1300 = vld [vmem:[#allocation2 + $0xc8] sm:$0xff]
    %v1301 = vld [vmem:[#allocation2 + $0xd0] sm:$0xff]
    %v1302 = vld [vmem:[#allocation2 + $0xd8] sm:$0xff]
    %1303 = vmatprep.subr.mxu0 %v66
    %1304 = vmatpush1.msra.mxu0 %v65
    %1305 = vmatprep.subr.mxu0 %v70
    %1306 = vmatpush1.msra.mxu0 %v69
    %1307 = vmatprep.subr.mxu0 %v74
    %1308 = vmatpush1.msra.mxu0 %v73
    %1309 = vmatprep.subr.mxu0 %v78
    %1310 = vmatpush1.msra.mxu0 %v77
    %1311 = vmatprep.subr.mxu0 %v82
    %1312 = vmatpush1.msra.mxu0 %v81
    %1313 = vmatprep.subr.mxu0 %v86
    %1314 = vmatpush1.msra.mxu0 %v85
    %1315 = vmatprep.subr.mxu0 %v90
    %1316 = vmatpush1.msra.mxu0 %v89
    %1317 = vmatprep.subr.mxu0 %v94
    %1318 = vmatpush1.msra.mxu0 %v93
    %1319 = vmatprep.subr.mxu0 %v98
    %1320 = vmatpush1.msra.mxu0 %v97
    %1321 = vmatprep.subr.mxu0 %v102
    %1322 = vmatpush1.msra.mxu0 %v101
    %1323 = vmatprep.subr.mxu0 %v106
    %1324 = vmatpush1.msra.mxu0 %v105
    %1325 = vmatprep.subr.mxu0 %v110
    %1326 = vmatpush1.msra.mxu0 %v109
    %1327 = vmatprep.subr.mxu0 %v114
    %1328 = vmatpush1.msra.mxu0 %v113
    %1329 = vmatprep.subr.mxu0 %v118
    %1330 = vmatpush1.msra.mxu0 %v117
    %1331 = vmatprep.subr.mxu0 %v122
    %1332 = vmatpush1.msra.mxu0 %v121
    %1333 = vmatprep.subr.mxu0 %v126
    %1334 = vmatpush1.msra.mxu0 %v125
    %1335 = vmatprep.subr.mxu0 0.0
    %1336 = vmatpush1.msra.mxu0 0.0
    %1337 = vmatprep.subr.mxu0 0.0
    %1338 = vmatpush1.msra.mxu0 0.0
    %1339 = vmatprep.subr.mxu0 0.0
    %1340 = vmatpush1.msra.mxu0 0.0
    %1341 = vmatprep.subr.mxu0 0.0
    %1342 = vmatpush1.msra.mxu0 0.0
    %1343 = vmatprep.subr.mxu0 0.0
    %1344 = vmatpush1.msra.mxu0 0.0
    %1345 = vmatprep.subr.mxu0 0.0
    %1346 = vmatpush1.msra.mxu0 0.0
    %1347 = vmatprep.subr.mxu0 0.0
    %1348 = vmatpush1.msra.mxu0 0.0
    %1349 = vmatprep.subr.mxu0 0.0
    %1350 = vmatpush1.msra.mxu0 0.0
    %1351 = vmatprep.subr.mxu0 0.0
    %1352 = vmatpush1.msra.mxu0 0.0
    %1353 = vmatprep.subr.mxu0 0.0
    %1354 = vmatpush1.msra.mxu0 0.0
    %1355 = vmatprep.subr.mxu0 0.0
    %1356 = vmatpush1.msra.mxu0 0.0
    %1357 = vmatprep.subr.mxu0 0.0
    %1358 = vmatpush1.msra.mxu0 0.0
    %1359 = vmatprep.subr.mxu0 0.0
    %1360 = vmatpush1.msra.mxu0 0.0
    %1361 = vmatprep.subr.mxu0 0.0
    %1362 = vmatpush1.msra.mxu0 0.0
    %1363 = vmatprep.subr.mxu0 0.0
    %1364 = vmatpush1.msra.mxu0 0.0
    %1365 = vmatprep.subr.mxu0 0.0
    %1366 = vmatpush1.msra.mxu0 0.0
    %1367 = vmatprep.mubr.f32.mxu0 0.0
    %1368 = vmatmul.mubr.f32.gmra.mrb[0].mxu0 %v1298
    %v1369 = vpop.f32.mrb[0].mxu0
    %v1370 = vadd.f32 0.0, %v1369
    %v1371 = vpop.f32.mrb[0].mxu0
    %v1372 = vadd.f32 0.0, %v1371
    %1373 = vdwg.mxu0
    %1374 = vmatprep.subr.mxu0 %v68
    %1375 = vmatpush1.msra.mxu0 %v67
    %1376 = vmatprep.subr.mxu0 %v72
    %1377 = vmatpush1.msra.mxu0 %v71
    %1378 = vmatprep.subr.mxu0 %v76
    %1379 = vmatpush1.msra.mxu0 %v75
    %1380 = vmatprep.subr.mxu0 %v80
    %1381 = vmatpush1.msra.mxu0 %v79
    %1382 = vmatprep.subr.mxu0 %v84
    %1383 = vmatpush1.msra.mxu0 %v83
    %1384 = vmatprep.subr.mxu0 %v88
    %1385 = vmatpush1.msra.mxu0 %v87
    %1386 = vmatprep.subr.mxu0 %v92
    %1387 = vmatpush1.msra.mxu0 %v91
    %1388 = vmatprep.subr.mxu0 %v96
    %1389 = vmatpush1.msra.mxu0 %v95
    %1390 = vmatprep.subr.mxu0 %v100
    %1391 = vmatpush1.msra.mxu0 %v99
    %1392 = vmatprep.subr.mxu0 %v104
    %1393 = vmatpush1.msra.mxu0 %v103
    %1394 = vmatprep.subr.mxu0 %v108
    %1395 = vmatpush1.msra.mxu0 %v107
    %1396 = vmatprep.subr.mxu0 %v112
    %1397 = vmatpush1.msra.mxu0 %v111
    %1398 = vmatprep.subr.mxu0 %v116
    %1399 = vmatpush1.msra.mxu0 %v115
    %1400 = vmatprep.subr.mxu0 %v120
    %1401 = vmatpush1.msra.mxu0 %v119
    %1402 = vmatprep.subr.mxu0 %v124
    %1403 = vmatpush1.msra.mxu0 %v123
    %1404 = vmatprep.subr.mxu0 %v128
    %1405 = vmatpush1.msra.mxu0 %v127
    %1406 = vmatprep.subr.mxu0 0.0
    %1407 = vmatpush1.msra.mxu0 0.0
    %1408 = vmatprep.subr.mxu0 0.0
    %1409 = vmatpush1.msra.mxu0 0.0
    %1410 = vmatprep.subr.mxu0 0.0
    %1411 = vmatpush1.msra.mxu0 0.0
    %1412 = vmatprep.subr.mxu0 0.0
    %1413 = vmatpush1.msra.mxu0 0.0
    %1414 = vmatprep.subr.mxu0 0.0
    %1415 = vmatpush1.msra.mxu0 0.0
    %1416 = vmatprep.subr.mxu0 0.0
    %1417 = vmatpush1.msra.mxu0 0.0
    %1418 = vmatprep.subr.mxu0 0.0
    %1419 = vmatpush1.msra.mxu0 0.0
    %1420 = vmatprep.subr.mxu0 0.0
    %1421 = vmatpush1.msra.mxu0 0.0
    %1422 = vmatprep.subr.mxu0 0.0
    %1423 = vmatpush1.msra.mxu0 0.0
    %1424 = vmatprep.subr.mxu0 0.0
    %1425 = vmatpush1.msra.mxu0 0.0
    %1426 = vmatprep.subr.mxu0 0.0
    %1427 = vmatpush1.msra.mxu0 0.0
    %1428 = vmatprep.subr.mxu0 0.0
    %1429 = vmatpush1.msra.mxu0 0.0
    %1430 = vmatprep.subr.mxu0 0.0
    %1431 = vmatpush1.msra.mxu0 0.0
    %1432 = vmatprep.subr.mxu0 0.0
    %1433 = vmatpush1.msra.mxu0 0.0
    %1434 = vmatprep.subr.mxu0 0.0
    %1435 = vmatpush1.msra.mxu0 0.0
    %1436 = vmatprep.subr.mxu0 0.0
    %1437 = vmatpush1.msra.mxu0 0.0
    %1438 = vmatprep.mubr.f32.mxu0 0.0
    %1439 = vmatmul.mubr.f32.gmra.mrb[0].mxu0 %v1298
    %v1440 = vpop.f32.mrb[0].mxu0
    %v1441 = vadd.f32 0.0, %v1440
    %v1442 = vpop.f32.mrb[0].mxu0
    %v1443 = vadd.f32 0.0, %v1442
    %1444 = vdwg.mxu0
    %v1445 = vadd.f32 %v1299, %v1370
    %v1446 = vadd.f32 %v1300, %v1372
    %v1447 = vadd.f32 %v1301, %v1441
    %v1448 = vadd.f32 %v1302, %v1443
    %v1449 = vxor.u32 %v1445, 2147483648
    %v1450 = vmul.f32 %v1449, 1.442695
    %v1451 = vpow.pop %v1450
    %v1452 = vadd.f32 %v1451, 1.0
    %v1453 = vrcp.pop %v1452
    %v1454 = vmul.f32 1.0, %v1453
    %v1455 = vxor.u32 %v1446, 2147483648
    %v1456 = vmul.f32 %v1455, 1.442695
    %v1457 = vpow.pop %v1456
    %v1458 = vadd.f32 %v1457, 1.0
    %v1459 = vrcp.pop %v1458
    %v1460 = vmul.f32 1.0, %v1459
    %v1461 = vtanh.pop %v1447
    %v1462 = vxor.u32 %v1448, 2147483648
    %v1463 = vmul.f32 %v1462, 1.442695
    %v1464 = vpow.pop %v1463
    %v1465 = vadd.f32 %v1464, 1.0
    %v1466 = vrcp.pop %v1465
    %v1467 = vmul.f32 1.0, %v1466
    %v1468 = vmul.f32 %v1460, %v1296
    %v1469 = vmul.f32 %v1454, %v1461
    %v1470 = vadd.f32 %v1468, %v1469
    %v1471 = vtanh.pop %v1470
    %v1472 = vmul.f32 %v1467, %v1471
    %v1473 = vld [vmem:[#allocation2 + $0x100] sm:$0xff]
    %v1474 = vld [vmem:[#allocation2 + $0x108] sm:$0xff]
    %v1475 = vld [vmem:[#allocation2 + $0x110] sm:$0xff]
    %v1476 = vld [vmem:[#allocation2 + $0x118] sm:$0xff]
    %1477 = vmatprep.subr.mxu0 %v66
    %1478 = vmatpush1.msra.mxu0 %v65
    %1479 = vmatprep.subr.mxu0 %v70
    %1480 = vmatpush1.msra.mxu0 %v69
    %1481 = vmatprep.subr.mxu0 %v74
    %1482 = vmatpush1.msra.mxu0 %v73
    %1483 = vmatprep.subr.mxu0 %v78
    %1484 = vmatpush1.msra.mxu0 %v77
    %1485 = vmatprep.subr.mxu0 %v82
    %1486 = vmatpush1.msra.mxu0 %v81
    %1487 = vmatprep.subr.mxu0 %v86
    %1488 = vmatpush1.msra.mxu0 %v85
    %1489 = vmatprep.subr.mxu0 %v90
    %1490 = vmatpush1.msra.mxu0 %v89
    %1491 = vmatprep.subr.mxu0 %v94
    %1492 = vmatpush1.msra.mxu0 %v93
    %1493 = vmatprep.subr.mxu0 %v98
    %1494 = vmatpush1.msra.mxu0 %v97
    %1495 = vmatprep.subr.mxu0 %v102
    %1496 = vmatpush1.msra.mxu0 %v101
    %1497 = vmatprep.subr.mxu0 %v106
    %1498 = vmatpush1.msra.mxu0 %v105
    %1499 = vmatprep.subr.mxu0 %v110
    %1500 = vmatpush1.msra.mxu0 %v109
    %1501 = vmatprep.subr.mxu0 %v114
    %1502 = vmatpush1.msra.mxu0 %v113
    %1503 = vmatprep.subr.mxu0 %v118
    %1504 = vmatpush1.msra.mxu0 %v117
    %1505 = vmatprep.subr.mxu0 %v122
    %1506 = vmatpush1.msra.mxu0 %v121
    %1507 = vmatprep.subr.mxu0 %v126
    %1508 = vmatpush1.msra.mxu0 %v125
    %1509 = vmatprep.subr.mxu0 0.0
    %1510 = vmatpush1.msra.mxu0 0.0
    %1511 = vmatprep.subr.mxu0 0.0
    %1512 = vmatpush1.msra.mxu0 0.0
    %1513 = vmatprep.subr.mxu0 0.0
    %1514 = vmatpush1.msra.mxu0 0.0
    %1515 = vmatprep.subr.mxu0 0.0
    %1516 = vmatpush1.msra.mxu0 0.0
    %1517 = vmatprep.subr.mxu0 0.0
    %1518 = vmatpush1.msra.mxu0 0.0
    %1519 = vmatprep.subr.mxu0 0.0
    %1520 = vmatpush1.msra.mxu0 0.0
    %1521 = vmatprep.subr.mxu0 0.0
    %1522 = vmatpush1.msra.mxu0 0.0
    %1523 = vmatprep.subr.mxu0 0.0
    %1524 = vmatpush1.msra.mxu0 0.0
    %1525 = vmatprep.subr.mxu0 0.0
    %1526 = vmatpush1.msra.mxu0 0.0
    %1527 = vmatprep.subr.mxu0 0.0
    %1528 = vmatpush1.msra.mxu0 0.0
    %1529 = vmatprep.subr.mxu0 0.0
    %1530 = vmatpush1.msra.mxu0 0.0
    %1531 = vmatprep.subr.mxu0 0.0
    %1532 = vmatpush1.msra.mxu0 0.0
    %1533 = vmatprep.subr.mxu0 0.0
    %1534 = vmatpush1.msra.mxu0 0.0
    %1535 = vmatprep.subr.mxu0 0.0
    %1536 = vmatpush1.msra.mxu0 0.0
    %1537 = vmatprep.subr.mxu0 0.0
    %1538 = vmatpush1.msra.mxu0 0.0
    %1539 = vmatprep.subr.mxu0 0.0
    %1540 = vmatpush1.msra.mxu0 0.0
    %1541 = vmatprep.mubr.f32.mxu0 0.0
    %1542 = vmatmul.mubr.f32.gmra.mrb[0].mxu0 %v1472
    %v1543 = vpop.f32.mrb[0].mxu0
    %v1544 = vadd.f32 0.0, %v1543
    %v1545 = vpop.f32.mrb[0].mxu0
    %v1546 = vadd.f32 0.0, %v1545
    %1547 = vdwg.mxu0
    %1548 = vmatprep.subr.mxu0 %v68
    %1549 = vmatpush1.msra.mxu0 %v67
    %1550 = vmatprep.subr.mxu0 %v72
    %1551 = vmatpush1.msra.mxu0 %v71
    %1552 = vmatprep.subr.mxu0 %v76
    %1553 = vmatpush1.msra.mxu0 %v75
    %1554 = vmatprep.subr.mxu0 %v80
    %1555 = vmatpush1.msra.mxu0 %v79
    %1556 = vmatprep.subr.mxu0 %v84
    %1557 = vmatpush1.msra.mxu0 %v83
    %1558 = vmatprep.subr.mxu0 %v88
    %1559 = vmatpush1.msra.mxu0 %v87
    %1560 = vmatprep.subr.mxu0 %v92
    %1561 = vmatpush1.msra.mxu0 %v91
    %1562 = vmatprep.subr.mxu0 %v96
    %1563 = vmatpush1.msra.mxu0 %v95
    %1564 = vmatprep.subr.mxu0 %v100
    %1565 = vmatpush1.msra.mxu0 %v99
    %1566 = vmatprep.subr.mxu0 %v104
    %1567 = vmatpush1.msra.mxu0 %v103
    %1568 = vmatprep.subr.mxu0 %v108
    %1569 = vmatpush1.msra.mxu0 %v107
    %1570 = vmatprep.subr.mxu0 %v112
    %1571 = vmatpush1.msra.mxu0 %v111
    %1572 = vmatprep.subr.mxu0 %v116
    %1573 = vmatpush1.msra.mxu0 %v115
    %1574 = vmatprep.subr.mxu0 %v120
    %1575 = vmatpush1.msra.mxu0 %v119
    %1576 = vmatprep.subr.mxu0 %v124
    %1577 = vmatpush1.msra.mxu0 %v123
    %1578 = vmatprep.subr.mxu0 %v128
    %1579 = vmatpush1.msra.mxu0 %v127
    %1580 = vmatprep.subr.mxu0 0.0
    %1581 = vmatpush1.msra.mxu0 0.0
    %1582 = vmatprep.subr.mxu0 0.0
    %1583 = vmatpush1.msra.mxu0 0.0
    %1584 = vmatprep.subr.mxu0 0.0
    %1585 = vmatpush1.msra.mxu0 0.0
    %1586 = vmatprep.subr.mxu0 0.0
    %1587 = vmatpush1.msra.mxu0 0.0
    %1588 = vmatprep.subr.mxu0 0.0
    %1589 = vmatpush1.msra.mxu0 0.0
    %1590 = vmatprep.subr.mxu0 0.0
    %1591 = vmatpush1.msra.mxu0 0.0
    %1592 = vmatprep.subr.mxu0 0.0
    %1593 = vmatpush1.msra.mxu0 0.0
    %1594 = vmatprep.subr.mxu0 0.0
    %1595 = vmatpush1.msra.mxu0 0.0
    %1596 = vmatprep.subr.mxu0 0.0
    %1597 = vmatpush1.msra.mxu0 0.0
    %1598 = vmatprep.subr.mxu0 0.0
    %1599 = vmatpush1.msra.mxu0 0.0
    %1600 = vmatprep.subr.mxu0 0.0
    %1601 = vmatpush1.msra.mxu0 0.0
    %1602 = vmatprep.subr.mxu0 0.0
    %1603 = vmatpush1.msra.mxu0 0.0
    %1604 = vmatprep.subr.mxu0 0.0
    %1605 = vmatpush1.msra.mxu0 0.0
    %1606 = vmatprep.subr.mxu0 0.0
    %1607 = vmatpush1.msra.mxu0 0.0
    %1608 = vmatprep.subr.mxu0 0.0
    %1609 = vmatpush1.msra.mxu0 0.0
    %1610 = vmatprep.subr.mxu0 0.0
    %1611 = vmatpush1.msra.mxu0 0.0
    %1612 = vmatprep.mubr.f32.mxu0 0.0
    %1613 = vmatmul.mubr.f32.gmra.mrb[0].mxu0 %v1472
    %v1614 = vpop.f32.mrb[0].mxu0
    %v1615 = vadd.f32 0.0, %v1614
    %v1616 = vpop.f32.mrb[0].mxu0
    %v1617 = vadd.f32 0.0, %v1616
    %1618 = vdwg.mxu0
    %v1619 = vadd.f32 %v1473, %v1544
    %v1620 = vadd.f32 %v1474, %v1546
    %v1621 = vadd.f32 %v1475, %v1615
    %v1622 = vadd.f32 %v1476, %v1617
    %v1623 = vxor.u32 %v1619, 2147483648
    %v1624 = vmul.f32 %v1623, 1.442695
    %v1625 = vpow.pop %v1624
    %v1626 = vadd.f32 %v1625, 1.0
    %v1627 = vrcp.pop %v1626
    %v1628 = vmul.f32 1.0, %v1627
    %v1629 = vxor.u32 %v1620, 2147483648
    %v1630 = vmul.f32 %v1629, 1.442695
    %v1631 = vpow.pop %v1630
    %v1632 = vadd.f32 %v1631, 1.0
    %v1633 = vrcp.pop %v1632
    %v1634 = vmul.f32 1.0, %v1633
    %v1635 = vtanh.pop %v1621
    %v1636 = vxor.u32 %v1622, 2147483648
    %v1637 = vmul.f32 %v1636, 1.442695
    %v1638 = vpow.pop %v1637
    %v1639 = vadd.f32 %v1638, 1.0
    %v1640 = vrcp.pop %v1639
    %v1641 = vmul.f32 1.0, %v1640
    %v1642 = vmul.f32 %v1634, %v1470
    %v1643 = vmul.f32 %v1628, %v1635
    %v1644 = vadd.f32 %v1642, %v1643
    %v1645 = vtanh.pop %v1644
    %v1646 = vmul.f32 %v1641, %v1645
    %v1647 = vld [vmem:[#allocation2 + $0x140] sm:$0xff]
    %v1648 = vld [vmem:[#allocation2 + $0x148] sm:$0xff]
    %v1649 = vld [vmem:[#allocation2 + $0x150] sm:$0xff]
    %v1650 = vld [vmem:[#allocation2 + $0x158] sm:$0xff]
    %1651 = vmatprep.subr.mxu0 %v66
    %1652 = vmatpush1.msra.mxu0 %v65
    %1653 = vmatprep.subr.mxu0 %v70
    %1654 = vmatpush1.msra.mxu0 %v69
    %1655 = vmatprep.subr.mxu0 %v74
    %1656 = vmatpush1.msra.mxu0 %v73
    %1657 = vmatprep.subr.mxu0 %v78
    %1658 = vmatpush1.msra.mxu0 %v77
    %1659 = vmatprep.subr.mxu0 %v82
    %1660 = vmatpush1.msra.mxu0 %v81
    %1661 = vmatprep.subr.mxu0 %v86
    %1662 = vmatpush1.msra.mxu0 %v85
    %1663 = vmatprep.subr.mxu0 %v90
    %1664 = vmatpush1.msra.mxu0 %v89
    %1665 = vmatprep.subr.mxu0 %v94
    %1666 = vmatpush1.msra.mxu0 %v93
    %1667 = vmatprep.subr.mxu0 %v98
    %1668 = vmatpush1.msra.mxu0 %v97
    %1669 = vmatprep.subr.mxu0 %v102
    %1670 = vmatpush1.msra.mxu0 %v101
    %1671 = vmatprep.subr.mxu0 %v106
    %1672 = vmatpush1.msra.mxu0 %v105
    %1673 = vmatprep.subr.mxu0 %v110
    %1674 = vmatpush1.msra.mxu0 %v109
    %1675 = vmatprep.subr.mxu0 %v114
    %1676 = vmatpush1.msra.mxu0 %v113
    %1677 = vmatprep.subr.mxu0 %v118
    %1678 = vmatpush1.msra.mxu0 %v117
    %1679 = vmatprep.subr.mxu0 %v122
    %1680 = vmatpush1.msra.mxu0 %v121
    %1681 = vmatprep.subr.mxu0 %v126
    %1682 = vmatpush1.msra.mxu0 %v125
    %1683 = vmatprep.subr.mxu0 0.0
    %1684 = vmatpush1.msra.mxu0 0.0
    %1685 = vmatprep.subr.mxu0 0.0
    %1686 = vmatpush1.msra.mxu0 0.0
    %1687 = vmatprep.subr.mxu0 0.0
    %1688 = vmatpush1.msra.mxu0 0.0
    %1689 = vmatprep.subr.mxu0 0.0
    %1690 = vmatpush1.msra.mxu0 0.0
    %1691 = vmatprep.subr.mxu0 0.0
    %1692 = vmatpush1.msra.mxu0 0.0
    %1693 = vmatprep.subr.mxu0 0.0
    %1694 = vmatpush1.msra.mxu0 0.0
    %1695 = vmatprep.subr.mxu0 0.0
    %1696 = vmatpush1.msra.mxu0 0.0
    %1697 = vmatprep.subr.mxu0 0.0
    %1698 = vmatpush1.msra.mxu0 0.0
    %1699 = vmatprep.subr.mxu0 0.0
    %1700 = vmatpush1.msra.mxu0 0.0
    %1701 = vmatprep.subr.mxu0 0.0
    %1702 = vmatpush1.msra.mxu0 0.0
    %1703 = vmatprep.subr.mxu0 0.0
    %1704 = vmatpush1.msra.mxu0 0.0
    %1705 = vmatprep.subr.mxu0 0.0
    %1706 = vmatpush1.msra.mxu0 0.0
    %1707 = vmatprep.subr.mxu0 0.0
    %1708 = vmatpush1.msra.mxu0 0.0
    %1709 = vmatprep.subr.mxu0 0.0
    %1710 = vmatpush1.msra.mxu0 0.0
    %1711 = vmatprep.subr.mxu0 0.0
    %1712 = vmatpush1.msra.mxu0 0.0
    %1713 = vmatprep.subr.mxu0 0.0
    %1714 = vmatpush1.msra.mxu0 0.0
    %1715 = vmatprep.mubr.f32.mxu0 0.0
    %1716 = vmatmul.mubr.f32.gmra.mrb[0].mxu0 %v1646
    %v1717 = vpop.f32.mrb[0].mxu0
    %v1718 = vadd.f32 0.0, %v1717
    %v1719 = vpop.f32.mrb[0].mxu0
    %v1720 = vadd.f32 0.0, %v1719
    %1721 = vdwg.mxu0
    %1722 = vmatprep.subr.mxu0 %v68
    %1723 = vmatpush1.msra.mxu0 %v67
    %1724 = vmatprep.subr.mxu0 %v72
    %1725 = vmatpush1.msra.mxu0 %v71
    %1726 = vmatprep.subr.mxu0 %v76
    %1727 = vmatpush1.msra.mxu0 %v75
    %1728 = vmatprep.subr.mxu0 %v80
    %1729 = vmatpush1.msra.mxu0 %v79
    %1730 = vmatprep.subr.mxu0 %v84
    %1731 = vmatpush1.msra.mxu0 %v83
    %1732 = vmatprep.subr.mxu0 %v88
    %1733 = vmatpush1.msra.mxu0 %v87
    %1734 = vmatprep.subr.mxu0 %v92
    %1735 = vmatpush1.msra.mxu0 %v91
    %1736 = vmatprep.subr.mxu0 %v96
    %1737 = vmatpush1.msra.mxu0 %v95
    %1738 = vmatprep.subr.mxu0 %v100
    %1739 = vmatpush1.msra.mxu0 %v99
    %1740 = vmatprep.subr.mxu0 %v104
    %1741 = vmatpush1.msra.mxu0 %v103
    %1742 = vmatprep.subr.mxu0 %v108
    %1743 = vmatpush1.msra.mxu0 %v107
    %1744 = vmatprep.subr.mxu0 %v112
    %1745 = vmatpush1.msra.mxu0 %v111
    %1746 = vmatprep.subr.mxu0 %v116
    %1747 = vmatpush1.msra.mxu0 %v115
    %1748 = vmatprep.subr.mxu0 %v120
    %1749 = vmatpush1.msra.mxu0 %v119
    %1750 = vmatprep.subr.mxu0 %v124
    %1751 = vmatpush1.msra.mxu0 %v123
    %1752 = vmatprep.subr.mxu0 %v128
    %1753 = vmatpush1.msra.mxu0 %v127
    %1754 = vmatprep.subr.mxu0 0.0
    %1755 = vmatpush1.msra.mxu0 0.0
    %1756 = vmatprep.subr.mxu0 0.0
    %1757 = vmatpush1.msra.mxu0 0.0
    %1758 = vmatprep.subr.mxu0 0.0
    %1759 = vmatpush1.msra.mxu0 0.0
    %1760 = vmatprep.subr.mxu0 0.0
    %1761 = vmatpush1.msra.mxu0 0.0
    %1762 = vmatprep.subr.mxu0 0.0
    %1763 = vmatpush1.msra.mxu0 0.0
    %1764 = vmatprep.subr.mxu0 0.0
    %1765 = vmatpush1.msra.mxu0 0.0
    %1766 = vmatprep.subr.mxu0 0.0
    %1767 = vmatpush1.msra.mxu0 0.0
    %1768 = vmatprep.subr.mxu0 0.0
    %1769 = vmatpush1.msra.mxu0 0.0
    %1770 = vmatprep.subr.mxu0 0.0
    %1771 = vmatpush1.msra.mxu0 0.0
    %1772 = vmatprep.subr.mxu0 0.0
    %1773 = vmatpush1.msra.mxu0 0.0
    %1774 = vmatprep.subr.mxu0 0.0
    %1775 = vmatpush1.msra.mxu0 0.0
    %1776 = vmatprep.subr.mxu0 0.0
    %1777 = vmatpush1.msra.mxu0 0.0
    %1778 = vmatprep.subr.mxu0 0.0
    %1779 = vmatpush1.msra.mxu0 0.0
    %1780 = vmatprep.subr.mxu0 0.0
    %1781 = vmatpush1.msra.mxu0 0.0
    %1782 = vmatprep.subr.mxu0 0.0
    %1783 = vmatpush1.msra.mxu0 0.0
    %1784 = vmatprep.subr.mxu0 0.0
    %1785 = vmatpush1.msra.mxu0 0.0
    %1786 = vmatprep.mubr.f32.mxu0 0.0
    %1787 = vmatmul.mubr.f32.gmra.mrb[0].mxu0 %v1646
    %v1788 = vpop.f32.mrb[0].mxu0
    %v1789 = vadd.f32 0.0, %v1788
    %v1790 = vpop.f32.mrb[0].mxu0
    %v1791 = vadd.f32 0.0, %v1790
    %1792 = vdwg.mxu0
    %v1793 = vadd.f32 %v1647, %v1718
    %v1794 = vadd.f32 %v1648, %v1720
    %v1795 = vadd.f32 %v1649, %v1789
    %v1796 = vadd.f32 %v1650, %v1791
    %v1797 = vxor.u32 %v1793, 2147483648
    %v1798 = vmul.f32 %v1797, 1.442695
    %v1799 = vpow.pop %v1798
    %v1800 = vadd.f32 %v1799, 1.0
    %v1801 = vrcp.pop %v1800
    %v1802 = vmul.f32 1.0, %v1801
    %v1803 = vxor.u32 %v1794, 2147483648
    %v1804 = vmul.f32 %v1803, 1.442695
    %v1805 = vpow.pop %v1804
    %v1806 = vadd.f32 %v1805, 1.0
    %v1807 = vrcp.pop %v1806
    %v1808 = vmul.f32 1.0, %v1807
    %v1809 = vtanh.pop %v1795
    %v1810 = vxor.u32 %v1796, 2147483648
    %v1811 = vmul.f32 %v1810, 1.442695
    %v1812 = vpow.pop %v1811
    %v1813 = vadd.f32 %v1812, 1.0
    %v1814 = vrcp.pop %v1813
    %v1815 = vmul.f32 1.0, %v1814
    %v1816 = vmul.f32 %v1808, %v1644
    %v1817 = vmul.f32 %v1802, %v1809
    %v1818 = vadd.f32 %v1816, %v1817
    %v1819 = vtanh.pop %v1818
    %v1820 = vmul.f32 %v1815, %v1819
    %v1821 = vld [vmem:[#allocation2 + $0x180] sm:$0xff]
    %v1822 = vld [vmem:[#allocation2 + $0x188] sm:$0xff]
    %v1823 = vld [vmem:[#allocation2 + $0x190] sm:$0xff]
    %v1824 = vld [vmem:[#allocation2 + $0x198] sm:$0xff]
    %1825 = vmatprep.subr.mxu0 %v66
    %1826 = vmatpush1.msra.mxu0 %v65
    %1827 = vmatprep.subr.mxu0 %v70
    %1828 = vmatpush1.msra.mxu0 %v69
    %1829 = vmatprep.subr.mxu0 %v74
    %1830 = vmatpush1.msra.mxu0 %v73
    %1831 = vmatprep.subr.mxu0 %v78
    %1832 = vmatpush1.msra.mxu0 %v77
    %1833 = vmatprep.subr.mxu0 %v82
    %1834 = vmatpush1.msra.mxu0 %v81
    %1835 = vmatprep.subr.mxu0 %v86
    %1836 = vmatpush1.msra.mxu0 %v85
    %1837 = vmatprep.subr.mxu0 %v90
    %1838 = vmatpush1.msra.mxu0 %v89
    %1839 = vmatprep.subr.mxu0 %v94
    %1840 = vmatpush1.msra.mxu0 %v93
    %1841 = vmatprep.subr.mxu0 %v98
    %1842 = vmatpush1.msra.mxu0 %v97
    %1843 = vmatprep.subr.mxu0 %v102
    %1844 = vmatpush1.msra.mxu0 %v101
    %1845 = vmatprep.subr.mxu0 %v106
    %1846 = vmatpush1.msra.mxu0 %v105
    %1847 = vmatprep.subr.mxu0 %v110
    %1848 = vmatpush1.msra.mxu0 %v109
    %1849 = vmatprep.subr.mxu0 %v114
    %1850 = vmatpush1.msra.mxu0 %v113
    %1851 = vmatprep.subr.mxu0 %v118
    %1852 = vmatpush1.msra.mxu0 %v117
    %1853 = vmatprep.subr.mxu0 %v122
    %1854 = vmatpush1.msra.mxu0 %v121
    %1855 = vmatprep.subr.mxu0 %v126
    %1856 = vmatpush1.msra.mxu0 %v125
    %1857 = vmatprep.subr.mxu0 0.0
    %1858 = vmatpush1.msra.mxu0 0.0
    %1859 = vmatprep.subr.mxu0 0.0
    %1860 = vmatpush1.msra.mxu0 0.0
    %1861 = vmatprep.subr.mxu0 0.0
    %1862 = vmatpush1.msra.mxu0 0.0
    %1863 = vmatprep.subr.mxu0 0.0
    %1864 = vmatpush1.msra.mxu0 0.0
    %1865 = vmatprep.subr.mxu0 0.0
    %1866 = vmatpush1.msra.mxu0 0.0
    %1867 = vmatprep.subr.mxu0 0.0
    %1868 = vmatpush1.msra.mxu0 0.0
    %1869 = vmatprep.subr.mxu0 0.0
    %1870 = vmatpush1.msra.mxu0 0.0
    %1871 = vmatprep.subr.mxu0 0.0
    %1872 = vmatpush1.msra.mxu0 0.0
    %1873 = vmatprep.subr.mxu0 0.0
    %1874 = vmatpush1.msra.mxu0 0.0
    %1875 = vmatprep.subr.mxu0 0.0
    %1876 = vmatpush1.msra.mxu0 0.0
    %1877 = vmatprep.subr.mxu0 0.0
    %1878 = vmatpush1.msra.mxu0 0.0
    %1879 = vmatprep.subr.mxu0 0.0
    %1880 = vmatpush1.msra.mxu0 0.0
    %1881 = vmatprep.subr.mxu0 0.0
    %1882 = vmatpush1.msra.mxu0 0.0
    %1883 = vmatprep.subr.mxu0 0.0
    %1884 = vmatpush1.msra.mxu0 0.0
    %1885 = vmatprep.subr.mxu0 0.0
    %1886 = vmatpush1.msra.mxu0 0.0
    %1887 = vmatprep.subr.mxu0 0.0
    %1888 = vmatpush1.msra.mxu0 0.0
    %1889 = vmatprep.mubr.f32.mxu0 0.0
    %1890 = vmatmul.mubr.f32.gmra.mrb[0].mxu0 %v1820
    %v1891 = vpop.f32.mrb[0].mxu0
    %v1892 = vadd.f32 0.0, %v1891
    %v1893 = vpop.f32.mrb[0].mxu0
    %v1894 = vadd.f32 0.0, %v1893
    %1895 = vdwg.mxu0
    %1896 = vmatprep.subr.mxu0 %v68
    %1897 = vmatpush1.msra.mxu0 %v67
    %1898 = vmatprep.subr.mxu0 %v72
    %1899 = vmatpush1.msra.mxu0 %v71
    %1900 = vmatprep.subr.mxu0 %v76
    %1901 = vmatpush1.msra.mxu0 %v75
    %1902 = vmatprep.subr.mxu0 %v80
    %1903 = vmatpush1.msra.mxu0 %v79
    %1904 = vmatprep.subr.mxu0 %v84
    %1905 = vmatpush1.msra.mxu0 %v83
    %1906 = vmatprep.subr.mxu0 %v88
    %1907 = vmatpush1.msra.mxu0 %v87
    %1908 = vmatprep.subr.mxu0 %v92
    %1909 = vmatpush1.msra.mxu0 %v91
    %1910 = vmatprep.subr.mxu0 %v96
    %1911 = vmatpush1.msra.mxu0 %v95
    %1912 = vmatprep.subr.mxu0 %v100
    %1913 = vmatpush1.msra.mxu0 %v99
    %1914 = vmatprep.subr.mxu0 %v104
    %1915 = vmatpush1.msra.mxu0 %v103
    %1916 = vmatprep.subr.mxu0 %v108
    %1917 = vmatpush1.msra.mxu0 %v107
    %1918 = vmatprep.subr.mxu0 %v112
    %1919 = vmatpush1.msra.mxu0 %v111
    %1920 = vmatprep.subr.mxu0 %v116
    %1921 = vmatpush1.msra.mxu0 %v115
    %1922 = vmatprep.subr.mxu0 %v120
    %1923 = vmatpush1.msra.mxu0 %v119
    %1924 = vmatprep.subr.mxu0 %v124
    %1925 = vmatpush1.msra.mxu0 %v123
    %1926 = vmatprep.subr.mxu0 %v128
    %1927 = vmatpush1.msra.mxu0 %v127
    %1928 = vmatprep.subr.mxu0 0.0
    %1929 = vmatpush1.msra.mxu0 0.0
    %1930 = vmatprep.subr.mxu0 0.0
    %1931 = vmatpush1.msra.mxu0 0.0
    %1932 = vmatprep.subr.mxu0 0.0
    %1933 = vmatpush1.msra.mxu0 0.0
    %1934 = vmatprep.subr.mxu0 0.0
    %1935 = vmatpush1.msra.mxu0 0.0
    %1936 = vmatprep.subr.mxu0 0.0
    %1937 = vmatpush1.msra.mxu0 0.0
    %1938 = vmatprep.subr.mxu0 0.0
    %1939 = vmatpush1.msra.mxu0 0.0
    %1940 = vmatprep.subr.mxu0 0.0
    %1941 = vmatpush1.msra.mxu0 0.0
    %1942 = vmatprep.subr.mxu0 0.0
    %1943 = vmatpush1.msra.mxu0 0.0
    %1944 = vmatprep.subr.mxu0 0.0
    %1945 = vmatpush1.msra.mxu0 0.0
    %1946 = vmatprep.subr.mxu0 0.0
    %1947 = vmatpush1.msra.mxu0 0.0
    %1948 = vmatprep.subr.mxu0 0.0
    %1949 = vmatpush1.msra.mxu0 0.0
    %1950 = vmatprep.subr.mxu0 0.0
    %1951 = vmatpush1.msra.mxu0 0.0
    %1952 = vmatprep.subr.mxu0 0.0
    %1953 = vmatpush1.msra.mxu0 0.0
    %1954 = vmatprep.subr.mxu0 0.0
    %1955 = vmatpush1.msra.mxu0 0.0
    %1956 = vmatprep.subr.mxu0 0.0
    %1957 = vmatpush1.msra.mxu0 0.0
    %1958 = vmatprep.subr.mxu0 0.0
    %1959 = vmatpush1.msra.mxu0 0.0
    %1960 = vmatprep.mubr.f32.mxu0 0.0
    %1961 = vmatmul.mubr.f32.gmra.mrb[0].mxu0 %v1820
    %v1962 = vpop.f32.mrb[0].mxu0
    %v1963 = vadd.f32 0.0, %v1962
    %v1964 = vpop.f32.mrb[0].mxu0
    %v1965 = vadd.f32 0.0, %v1964
    %1966 = vdwg.mxu0
    %v1967 = vadd.f32 %v1821, %v1892
    %v1968 = vadd.f32 %v1822, %v1894
    %v1969 = vadd.f32 %v1823, %v1963
    %v1970 = vadd.f32 %v1824, %v1965
    %v1971 = vxor.u32 %v1967, 2147483648
    %v1972 = vmul.f32 %v1971, 1.442695
    %v1973 = vpow.pop %v1972
    %v1974 = vadd.f32 %v1973, 1.0
    %v1975 = vrcp.pop %v1974
    %v1976 = vmul.f32 1.0, %v1975
    %v1977 = vxor.u32 %v1968, 2147483648
    %v1978 = vmul.f32 %v1977, 1.442695
    %v1979 = vpow.pop %v1978
    %v1980 = vadd.f32 %v1979, 1.0
    %v1981 = vrcp.pop %v1980
    %v1982 = vmul.f32 1.0, %v1981
    %v1983 = vtanh.pop %v1969
    %v1984 = vxor.u32 %v1970, 2147483648
    %v1985 = vmul.f32 %v1984, 1.442695
    %v1986 = vpow.pop %v1985
    %v1987 = vadd.f32 %v1986, 1.0
    %v1988 = vrcp.pop %v1987
    %v1989 = vmul.f32 1.0, %v1988
    %v1990 = vmul.f32 %v1982, %v1818
    %v1991 = vmul.f32 %v1976, %v1983
    %v1992 = vadd.f32 %v1990, %v1991
    %v1993 = vtanh.pop %v1992
    %v1994 = vmul.f32 %v1989, %v1993
    %v1995 = vld [vmem:[#allocation2 + $0x1c0] sm:$0xff]
    %v1996 = vld [vmem:[#allocation2 + $0x1c8] sm:$0xff]
    %v1997 = vld [vmem:[#allocation2 + $0x1d0] sm:$0xff]
    %v1998 = vld [vmem:[#allocation2 + $0x1d8] sm:$0xff]
    %1999 = vmatprep.subr.mxu0 %v66
    %2000 = vmatpush1.msra.mxu0 %v65
    %2001 = vmatprep.subr.mxu0 %v70
    %2002 = vmatpush1.msra.mxu0 %v69
    %2003 = vmatprep.subr.mxu0 %v74
    %2004 = vmatpush1.msra.mxu0 %v73
    %2005 = vmatprep.subr.mxu0 %v78
    %2006 = vmatpush1.msra.mxu0 %v77
    %2007 = vmatprep.subr.mxu0 %v82
    %2008 = vmatpush1.msra.mxu0 %v81
    %2009 = vmatprep.subr.mxu0 %v86
    %2010 = vmatpush1.msra.mxu0 %v85
    %2011 = vmatprep.subr.mxu0 %v90
    %2012 = vmatpush1.msra.mxu0 %v89
    %2013 = vmatprep.subr.mxu0 %v94
    %2014 = vmatpush1.msra.mxu0 %v93
    %2015 = vmatprep.subr.mxu0 %v98
    %2016 = vmatpush1.msra.mxu0 %v97
    %2017 = vmatprep.subr.mxu0 %v102
    %2018 = vmatpush1.msra.mxu0 %v101
    %2019 = vmatprep.subr.mxu0 %v106
    %2020 = vmatpush1.msra.mxu0 %v105
    %2021 = vmatprep.subr.mxu0 %v110
    %2022 = vmatpush1.msra.mxu0 %v109
    %2023 = vmatprep.subr.mxu0 %v114
    %2024 = vmatpush1.msra.mxu0 %v113
    %2025 = vmatprep.subr.mxu0 %v118
    %2026 = vmatpush1.msra.mxu0 %v117
    %2027 = vmatprep.subr.mxu0 %v122
    %2028 = vmatpush1.msra.mxu0 %v121
    %2029 = vmatprep.subr.mxu0 %v126
    %2030 = vmatpush1.msra.mxu0 %v125
    %2031 = vmatprep.subr.mxu0 0.0
    %2032 = vmatpush1.msra.mxu0 0.0
    %2033 = vmatprep.subr.mxu0 0.0
    %2034 = vmatpush1.msra.mxu0 0.0
    %2035 = vmatprep.subr.mxu0 0.0
    %2036 = vmatpush1.msra.mxu0 0.0
    %2037 = vmatprep.subr.mxu0 0.0
    %2038 = vmatpush1.msra.mxu0 0.0
    %2039 = vmatprep.subr.mxu0 0.0
    %2040 = vmatpush1.msra.mxu0 0.0
    %2041 = vmatprep.subr.mxu0 0.0
    %2042 = vmatpush1.msra.mxu0 0.0
    %2043 = vmatprep.subr.mxu0 0.0
    %2044 = vmatpush1.msra.mxu0 0.0
    %2045 = vmatprep.subr.mxu0 0.0
    %2046 = vmatpush1.msra.mxu0 0.0
    %2047 = vmatprep.subr.mxu0 0.0
    %2048 = vmatpush1.msra.mxu0 0.0
    %2049 = vmatprep.subr.mxu0 0.0
    %2050 = vmatpush1.msra.mxu0 0.0
    %2051 = vmatprep.subr.mxu0 0.0
    %2052 = vmatpush1.msra.mxu0 0.0
    %2053 = vmatprep.subr.mxu0 0.0
    %2054 = vmatpush1.msra.mxu0 0.0
    %2055 = vmatprep.subr.mxu0 0.0
    %2056 = vmatpush1.msra.mxu0 0.0
    %2057 = vmatprep.subr.mxu0 0.0
    %2058 = vmatpush1.msra.mxu0 0.0
    %2059 = vmatprep.subr.mxu0 0.0
    %2060 = vmatpush1.msra.mxu0 0.0
    %2061 = vmatprep.subr.mxu0 0.0
    %2062 = vmatpush1.msra.mxu0 0.0
    %2063 = vmatprep.mubr.f32.mxu0 0.0
    %2064 = vmatmul.mubr.f32.gmra.mrb[0].mxu0 %v1994
    %v2065 = vpop.f32.mrb[0].mxu0
    %v2066 = vadd.f32 0.0, %v2065
    %v2067 = vpop.f32.mrb[0].mxu0
    %v2068 = vadd.f32 0.0, %v2067
    %2069 = vdwg.mxu0
    %2070 = vmatprep.subr.mxu0 %v68
    %2071 = vmatpush1.msra.mxu0 %v67
    %2072 = vmatprep.subr.mxu0 %v72
    %2073 = vmatpush1.msra.mxu0 %v71
    %2074 = vmatprep.subr.mxu0 %v76
    %2075 = vmatpush1.msra.mxu0 %v75
    %2076 = vmatprep.subr.mxu0 %v80
    %2077 = vmatpush1.msra.mxu0 %v79
    %2078 = vmatprep.subr.mxu0 %v84
    %2079 = vmatpush1.msra.mxu0 %v83
    %2080 = vmatprep.subr.mxu0 %v88
    %2081 = vmatpush1.msra.mxu0 %v87
    %2082 = vmatprep.subr.mxu0 %v92
    %2083 = vmatpush1.msra.mxu0 %v91
    %2084 = vmatprep.subr.mxu0 %v96
    %2085 = vmatpush1.msra.mxu0 %v95
    %2086 = vmatprep.subr.mxu0 %v100
    %2087 = vmatpush1.msra.mxu0 %v99
    %2088 = vmatprep.subr.mxu0 %v104
    %2089 = vmatpush1.msra.mxu0 %v103
    %2090 = vmatprep.subr.mxu0 %v108
    %2091 = vmatpush1.msra.mxu0 %v107
    %2092 = vmatprep.subr.mxu0 %v112
    %2093 = vmatpush1.msra.mxu0 %v111
    %2094 = vmatprep.subr.mxu0 %v116
    %2095 = vmatpush1.msra.mxu0 %v115
    %2096 = vmatprep.subr.mxu0 %v120
    %2097 = vmatpush1.msra.mxu0 %v119
    %2098 = vmatprep.subr.mxu0 %v124
    %2099 = vmatpush1.msra.mxu0 %v123
    %2100 = vmatprep.subr.mxu0 %v128
    %2101 = vmatpush1.msra.mxu0 %v127
    %2102 = vmatprep.subr.mxu0 0.0
    %2103 = vmatpush1.msra.mxu0 0.0
    %2104 = vmatprep.subr.mxu0 0.0
    %2105 = vmatpush1.msra.mxu0 0.0
    %2106 = vmatprep.subr.mxu0 0.0
    %2107 = vmatpush1.msra.mxu0 0.0
    %2108 = vmatprep.subr.mxu0 0.0
    %2109 = vmatpush1.msra.mxu0 0.0
    %2110 = vmatprep.subr.mxu0 0.0
    %2111 = vmatpush1.msra.mxu0 0.0
    %2112 = vmatprep.subr.mxu0 0.0
    %2113 = vmatpush1.msra.mxu0 0.0
    %2114 = vmatprep.subr.mxu0 0.0
    %2115 = vmatpush1.msra.mxu0 0.0
    %2116 = vmatprep.subr.mxu0 0.0
    %2117 = vmatpush1.msra.mxu0 0.0
    %2118 = vmatprep.subr.mxu0 0.0
    %2119 = vmatpush1.msra.mxu0 0.0
    %2120 = vmatprep.subr.mxu0 0.0
    %2121 = vmatpush1.msra.mxu0 0.0
    %2122 = vmatprep.subr.mxu0 0.0
    %2123 = vmatpush1.msra.mxu0 0.0
    %2124 = vmatprep.subr.mxu0 0.0
    %2125 = vmatpush1.msra.mxu0 0.0
    %2126 = vmatprep.subr.mxu0 0.0
    %2127 = vmatpush1.msra.mxu0 0.0
    %2128 = vmatprep.subr.mxu0 0.0
    %2129 = vmatpush1.msra.mxu0 0.0
    %2130 = vmatprep.subr.mxu0 0.0
    %2131 = vmatpush1.msra.mxu0 0.0
    %2132 = vmatprep.subr.mxu0 0.0
    %2133 = vmatpush1.msra.mxu0 0.0
    %2134 = vmatprep.mubr.f32.mxu0 0.0
    %2135 = vmatmul.mubr.f32.gmra.mrb[0].mxu0 %v1994
    %v2136 = vpop.f32.mrb[0].mxu0
    %v2137 = vadd.f32 0.0, %v2136
    %v2138 = vpop.f32.mrb[0].mxu0
    %v2139 = vadd.f32 0.0, %v2138
    %2140 = vdwg.mxu0
    %v2141 = vadd.f32 %v1995, %v2066
    %v2142 = vadd.f32 %v1996, %v2068
    %v2143 = vadd.f32 %v1997, %v2137
    %v2144 = vadd.f32 %v1998, %v2139
    %v2145 = vxor.u32 %v2141, 2147483648
    %v2146 = vmul.f32 %v2145, 1.442695
    %v2147 = vpow.pop %v2146
    %v2148 = vadd.f32 %v2147, 1.0
    %v2149 = vrcp.pop %v2148
    %v2150 = vmul.f32 1.0, %v2149
    %v2151 = vxor.u32 %v2142, 2147483648
    %v2152 = vmul.f32 %v2151, 1.442695
    %v2153 = vpow.pop %v2152
    %v2154 = vadd.f32 %v2153, 1.0
    %v2155 = vrcp.pop %v2154
    %v2156 = vmul.f32 1.0, %v2155
    %v2157 = vtanh.pop %v2143
    %v2158 = vxor.u32 %v2144, 2147483648
    %v2159 = vmul.f32 %v2158, 1.442695
    %v2160 = vpow.pop %v2159
    %v2161 = vadd.f32 %v2160, 1.0
    %v2162 = vrcp.pop %v2161
    %v2163 = vmul.f32 1.0, %v2162
    %v2164 = vmul.f32 %v2156, %v1992
    %v2165 = vmul.f32 %v2150, %v2157
    %v2166 = vadd.f32 %v2164, %v2165
    %v2167 = vtanh.pop %v2166
    %v2168 = vmul.f32 %v2163, %v2167
    %v2169 = vld [vmem:[#allocation2 + $0x1e0] sm:$0xff]
    %v2170 = vld [vmem:[#allocation2 + $0x1f0] sm:$0xff]
    %v2171 = vld [vmem:[#allocation2 + $0x1f8] sm:$0xff]
    %v2172 = vxor.u32 %v2169, 2147483648
    %v2173 = vmul.f32 %v2172, 1.442695
    %v2174 = vpow.pop %v2173
    %v2175 = vadd.f32 %v2174, 1.0
    %v2176 = vrcp.pop %v2175
    %v2177 = vmul.f32 1.0, %v2176
    %v2178 = vtanh.pop %v2170
    %v2179 = vxor.u32 %v2171, 2147483648
    %v2180 = vmul.f32 %v2179, 1.442695
    %v2181 = vpow.pop %v2180
    %v2182 = vadd.f32 %v2181, 1.0
    %v2183 = vrcp.pop %v2182
    %v2184 = vmul.f32 1.0, %v2183
    %v2185 = vmul.f32 %v2177, %v2178
    %v2186 = vtanh.pop %v2185
    %v2187 = vmul.f32 %v2184, %v2186
    %v2188 = vld [vmem:[#allocation8] sm:$0xff]
    %v2189 = vld [vmem:[#allocation8 + $0x8] sm:$0xff]
    %v2190 = vld [vmem:[#allocation8 + $0x10] sm:$0xff]
    %v2191 = vld [vmem:[#allocation8 + $0x18] sm:$0xff]
    %v2192 = vld [vmem:[#allocation8 + $0x20] sm:$0xff]
    %v2193 = vld [vmem:[#allocation8 + $0x28] sm:$0xff]
    %v2194 = vld [vmem:[#allocation8 + $0x30] sm:$0xff]
    %v2195 = vld [vmem:[#allocation8 + $0x38] sm:$0xff]
    %v2196 = vld [vmem:[#allocation8 + $0x40] sm:$0xff]
    %v2197 = vld [vmem:[#allocation8 + $0x48] sm:$0xff]
    %v2198 = vld [vmem:[#allocation8 + $0x50] sm:$0xff]
    %v2199 = vld [vmem:[#allocation8 + $0x58] sm:$0xff]
    %v2200 = vld [vmem:[#allocation8 + $0x60] sm:$0xff]
    %v2201 = vld [vmem:[#allocation8 + $0x68] sm:$0xff]
    %v2202 = vld [vmem:[#allocation8 + $0x70] sm:$0xff]
    %v2203 = vld [vmem:[#allocation8 + $0x78] sm:$0xff]
    %v2204 = vld [vmem:[#allocation8 + $0x80] sm:$0xff]
    %v2205 = vld [vmem:[#allocation8 + $0x88] sm:$0xff]
    %v2206 = vld [vmem:[#allocation8 + $0x90] sm:$0xff]
    %v2207 = vld [vmem:[#allocation8 + $0x98] sm:$0xff]
    %v2208 = vld [vmem:[#allocation8 + $0xa0] sm:$0xff]
    %v2209 = vld [vmem:[#allocation8 + $0xa8] sm:$0xff]
    %v2210 = vld [vmem:[#allocation8 + $0xb0] sm:$0xff]
    %v2211 = vld [vmem:[#allocation8 + $0xb8] sm:$0xff]
    %v2212 = vld [vmem:[#allocation8 + $0xc0] sm:$0xff]
    %v2213 = vld [vmem:[#allocation8 + $0xc8] sm:$0xff]
    %v2214 = vld [vmem:[#allocation8 + $0xd0] sm:$0xff]
    %v2215 = vld [vmem:[#allocation8 + $0xd8] sm:$0xff]
    %v2216 = vld [vmem:[#allocation8 + $0xe0] sm:$0xff]
    %v2217 = vld [vmem:[#allocation8 + $0xe8] sm:$0xff]
    %v2218 = vld [vmem:[#allocation8 + $0xf0] sm:$0xff]
    %v2219 = vld [vmem:[#allocation8 + $0xf8] sm:$0xff]
    %v2220 = vld [vmem:[%s5] sm:$0x1]
    %v2222 = vlaneseq
    %v2223 = vshrl.u32 %v2222, 7
    %v2224 = vsub.s32 0, %v2223
    %v2225 = vrot.slane %v2220, %v2224
    %2227 = vmatprep.subr.mxu0 0.0
    %2228 = vmatpush1.msra.mxu0 %v2188
    %2229 = vmatprep.subr.mxu0 0.0
    %2230 = vmatpush1.msra.mxu0 %v2189
    %2231 = vmatprep.subr.mxu0 0.0
    %2232 = vmatpush1.msra.mxu0 %v2190
    %2233 = vmatprep.subr.mxu0 0.0
    %2234 = vmatpush1.msra.mxu0 %v2191
    %2235 = vmatprep.subr.mxu0 0.0
    %2236 = vmatpush1.msra.mxu0 %v2192
    %2237 = vmatprep.subr.mxu0 0.0
    %2238 = vmatpush1.msra.mxu0 %v2193
    %2239 = vmatprep.subr.mxu0 0.0
    %2240 = vmatpush1.msra.mxu0 %v2194
    %2241 = vmatprep.subr.mxu0 0.0
    %2242 = vmatpush1.msra.mxu0 %v2195
    %2243 = vmatprep.subr.mxu0 0.0
    %2244 = vmatpush1.msra.mxu0 %v2196
    %2245 = vmatprep.subr.mxu0 0.0
    %2246 = vmatpush1.msra.mxu0 %v2197
    %2247 = vmatprep.subr.mxu0 0.0
    %2248 = vmatpush1.msra.mxu0 %v2198
    %2249 = vmatprep.subr.mxu0 0.0
    %2250 = vmatpush1.msra.mxu0 %v2199
    %2251 = vmatprep.subr.mxu0 0.0
    %2252 = vmatpush1.msra.mxu0 %v2200
    %2253 = vmatprep.subr.mxu0 0.0
    %2254 = vmatpush1.msra.mxu0 %v2201
    %2255 = vmatprep.subr.mxu0 0.0
    %2256 = vmatpush1.msra.mxu0 %v2202
    %2257 = vmatprep.subr.mxu0 0.0
    %2258 = vmatpush1.msra.mxu0 %v2203
    %2259 = vmatprep.subr.mxu0 0.0
    %2260 = vmatpush1.msra.mxu0 %v2204
    %2261 = vmatprep.subr.mxu0 0.0
    %2262 = vmatpush1.msra.mxu0 %v2205
    %2263 = vmatprep.subr.mxu0 0.0
    %2264 = vmatpush1.msra.mxu0 %v2206
    %2265 = vmatprep.subr.mxu0 0.0
    %2266 = vmatpush1.msra.mxu0 %v2207
    %2267 = vmatprep.subr.mxu0 0.0
    %2268 = vmatpush1.msra.mxu0 %v2208
    %2269 = vmatprep.subr.mxu0 0.0
    %2270 = vmatpush1.msra.mxu0 %v2209
    %2271 = vmatprep.subr.mxu0 0.0
    %2272 = vmatpush1.msra.mxu0 %v2210
    %2273 = vmatprep.subr.mxu0 0.0
    %2274 = vmatpush1.msra.mxu0 %v2211
    %2275 = vmatprep.subr.mxu0 0.0
    %2276 = vmatpush1.msra.mxu0 %v2212
    %2277 = vmatprep.subr.mxu0 0.0
    %2278 = vmatpush1.msra.mxu0 %v2213
    %2279 = vmatprep.subr.mxu0 0.0
    %2280 = vmatpush1.msra.mxu0 %v2214
    %2281 = vmatprep.subr.mxu0 0.0
    %2282 = vmatpush1.msra.mxu0 %v2215
    %2283 = vmatprep.subr.mxu0 0.0
    %2284 = vmatpush1.msra.mxu0 %v2216
    %2285 = vmatprep.subr.mxu0 0.0
    %2286 = vmatpush1.msra.mxu0 %v2217
    %2287 = vmatprep.subr.mxu0 0.0
    %2288 = vmatpush1.msra.mxu0 %v2218
    %2289 = vmatprep.subr.mxu0 0.0
    %2290 = vmatpush1.msra.mxu0 %v2219
    %2291 = vmatprep.mubr.f32.mxu0 %v2187
    %2292 = vmatmul.mubr.f32.gmra.mrb[0].mxu0 %v2168
    %v2293 = vpop.f32.mrb[0].mxu0
    %v2294 = vadd.f32 %v2225, %v2293
    %v2295 = vpop.f32.mrb[0].mxu0
    %2296 = vdwg.mxu0
    %2297 = vst [vmem:[#allocation9] sm:$0xff] %v2294
    // Predicated region
    $region38: #{tpu_custom_call.1} parent=1 // pred_check
      _
    $region39: #{tpu_custom_call.1} parent=1 // pred_check_branch
      %2299 = sbr.rel (0) target = $region41
    $region40: #{tpu_custom_call.1} parent=1 // pred_region
      %s2301 = ssub.s32 128, 128
      %2302 = vsyncadd [#allocation5], %s2301
      %s2304 = sshll.u32 [#allocation9], 4
      %s2305 = int_to_ptr.vmem [resolvable:$true] %s2304
      %2307 = dma.vmem_to_hbm [thread:$0]  %s2305, 128, %s6, [#allocation5]
    $region41: #{tpu_custom_call.1} parent=1 // pred_fallthru
      _
    // Predicated region
    $region42: #{tpu_custom_call.1} parent=1 // pred_check
      _
    $region43: #{tpu_custom_call.1} parent=1 // pred_check_branch
      %2309 = sbr.rel (0) target = $region45
    $region44: #{tpu_custom_call.1} parent=1 // pred_region
      %2310 = dma.done [#allocation5], 128
    $region45: #{tpu_custom_call.1} parent=1 // pred_fallthru
      _
    %2311 = vsyncpa [#allocation4], 1
    %2312 = vsyncpa [#allocation7], 1
    %2313 = vsyncpa [#allocation5], 1

</llo_original>
